<compile_context>
chip_gen: v7x
topology: tpu7x:2x2x1
jax: 0.10.0
libtpu: 0.0.40
codegen_flags: <defaults>
</compile_context>

<pallas_src>
import jax
import jax.numpy as jnp
from jax.experimental import pallas as pl
from jax.experimental.pallas import tpu as pltpu

INPUT_DIM = 69
HIDDEN_DIM = 128
OUTPUT_DIM = 4
PADDED_OUTPUT_DIM = 128   # lane-dense output block; wrapper slices [:, :OUTPUT_DIM]
NUM_BLOCKS = 4


def mlp_backbone_kernel(x_ref, w_in_ref, b_in_ref,
                        w1_ref, b1_ref, w2_ref, b2_ref,
                        w_out_ref, b_out_ref, o_ref):
    # Input layer: (TB, 69) @ (69, 128) + ReLU. bf16 operands, f32 accumulate;
    # Mosaic masks the unaligned K=69 contraction.
    h = jnp.dot(x_ref[...].astype(jnp.bfloat16), w_in_ref[...],
                preferred_element_type=jnp.float32)
    h = jnp.maximum(h + b_in_ref[...], 0.0)

    # Residual blocks (static unroll; NUM_BLOCKS is small and fixed).
    for i in range(NUM_BLOCKS):
        out = jnp.dot(h.astype(jnp.bfloat16), w1_ref[i],
                      preferred_element_type=jnp.float32)
        out = jnp.maximum(out + b1_ref[i], 0.0)
        # TODO(synk): training-mode dropout (pltpu.prng_* Bernoulli mask); identity in eval mode.
        out = jnp.dot(out.astype(jnp.bfloat16), w2_ref[i],
                      preferred_element_type=jnp.float32)
        out = out + b2_ref[i]
        h = jnp.maximum(out + h, 0.0)

    # Output layer: lane-dense (TB, 128) store; columns OUTPUT_DIM.. are exact
    # zeros because the w_out / b_out padding is zero.
    y = jnp.dot(h.astype(jnp.bfloat16), w_out_ref[...],
                preferred_element_type=jnp.float32)
    o_ref[...] = y + b_out_ref[...]


def _auto_block_batch(batch):
    """Batch-tile heuristic: as large as possible (amortize ~0.35us grid-step
    overhead, long MXU M-streams given K=N=128 underfills the 256-wide MXU on
    v6e/v7x), but at least 2 tiles so both v7x TensorCores get work, capped at
    2048 rows so double-buffered f32 tiles + compiler temps stay far below the
    32 MiB scoped-VMEM limit on every generation."""
    if batch <= 16:
        return 8
    half = pl.cdiv(batch, 2)
    return min(pl.cdiv(half, 8) * 8, 2048)


def mlp_backbone(x, prepared_params, *, block_batch=None):
    """Forward pass. `prepared_params` must come from prepare_params().
    x: (B, INPUT_DIM) float32. Returns (B, OUTPUT_DIM) float32."""
    w_in, b_in, w1, b1, w2, b2, w_out_p, b_out_p = prepared_params
    B = x.shape[0]
    tb = int(block_batch) if block_batch is not None else _auto_block_batch(B)
    grid = (pl.cdiv(B, tb),)

    const2 = lambda i: (0, 0)
    const3 = lambda i: (0, 0, 0)
    grid_spec = pltpu.PrefetchScalarGridSpec(
        num_scalar_prefetch=0,
        grid=grid,
        in_specs=[
            # Streaming input tile; last dim == full array dim (69) is legal.
            pl.BlockSpec((tb, INPUT_DIM), lambda i: (i, 0)),
            # Resident weights / biases (constant index maps -> DMA'd once).
            # NOTE: pipeline_mode=pl.Buffered(1) would drop their dead second
            # buffers (~300 KiB) but VMEM is nowhere near the constraint here,
            # so it is omitted to keep lowering maximally portable.
            pl.BlockSpec((INPUT_DIM, HIDDEN_DIM), const2),                 # w_in
            pl.BlockSpec((1, HIDDEN_DIM), const2),                         # b_in
            pl.BlockSpec((NUM_BLOCKS, HIDDEN_DIM, HIDDEN_DIM), const3),    # w1
            pl.BlockSpec((NUM_BLOCKS, 1, HIDDEN_DIM), const3),             # b1
            pl.BlockSpec((NUM_BLOCKS, HIDDEN_DIM, HIDDEN_DIM), const3),    # w2
            pl.BlockSpec((NUM_BLOCKS, 1, HIDDEN_DIM), const3),             # b2
            pl.BlockSpec((HIDDEN_DIM, PADDED_OUTPUT_DIM), const2),         # w_out (lane-padded)
            pl.BlockSpec((1, PADDED_OUTPUT_DIM), const2),                  # b_out (lane-padded)
        ],
        out_specs=pl.BlockSpec((tb, PADDED_OUTPUT_DIM), lambda i: (i, 0)),
    )

    # Advisory cost hint so XLA can overlap this call with surrounding HLO.
    flops = 2 * B * (INPUT_DIM * HIDDEN_DIM
                     + 2 * NUM_BLOCKS * HIDDEN_DIM * HIDDEN_DIM
                     + HIDDEN_DIM * PADDED_OUTPUT_DIM)
    weight_bytes = sum(int(p.size) * p.dtype.itemsize
                       for p in (w_in, b_in, w1, b1, w2, b2, w_out_p, b_out_p))
    bytes_accessed = (weight_bytes
                      + B * INPUT_DIM * 4
                      + B * PADDED_OUTPUT_DIM * 4)

    out = pl.pallas_call(
        mlp_backbone_kernel,
        out_shape=jax.ShapeDtypeStruct((B, PADDED_OUTPUT_DIM), jnp.float32),
        grid_spec=grid_spec,
        compiler_params=pltpu.CompilerParams(
            dimension_semantics=("parallel",),    # batch tiles shard over both v7x TCs
            vmem_limit_bytes=32 * 1024 * 1024,    # explicit (v5e scoped default is 16 MiB)
        ),
        cost_estimate=pl.CostEstimate(
            flops=flops, transcendentals=0, bytes_accessed=bytes_accessed),
    )(x, w_in, b_in, w1, b1, w2, b2, w_out_p, b_out_p)
    return out[:, :OUTPUT_DIM]


def init_params(key):
    """Deterministic synthetic parameters (shapes match the PyTorch module).
    Weights are bf16 (MXU-native, halves resident/HBM weight bytes); biases
    stay f32 (added post-accumulation on the VPU)."""
    ks = jax.random.split(key, 8)
    scale = 0.05
    w_in = (scale * jax.random.normal(ks[0], (INPUT_DIM, HIDDEN_DIM))).astype(jnp.bfloat16)
    b_in = scale * jax.random.normal(ks[1], (1, HIDDEN_DIM), jnp.float32)
    w1 = (scale * jax.random.normal(ks[2], (NUM_BLOCKS, HIDDEN_DIM, HIDDEN_DIM))).astype(jnp.bfloat16)
    b1 = scale * jax.random.normal(ks[3], (NUM_BLOCKS, 1, HIDDEN_DIM), jnp.float32)
    w2 = (scale * jax.random.normal(ks[4], (NUM_BLOCKS, HIDDEN_DIM, HIDDEN_DIM))).astype(jnp.bfloat16)
    b2 = scale * jax.random.normal(ks[5], (NUM_BLOCKS, 1, HIDDEN_DIM), jnp.float32)
    w_out = (scale * jax.random.normal(ks[6], (HIDDEN_DIM, OUTPUT_DIM))).astype(jnp.bfloat16)
    b_out = scale * jax.random.normal(ks[7], (1, OUTPUT_DIM), jnp.float32)
    return (w_in, b_in, w1, b1, w2, b2, w_out, b_out)


def prepare_params(params):
    """One-time parameter prep, hoisted off the per-call hot path:
    zero-pad w_out / b_out to 128 output lanes for a lane-dense output store."""
    w_in, b_in, w1, b1, w2, b2, w_out, b_out = params
    w_out_p = jnp.zeros((HIDDEN_DIM, PADDED_OUTPUT_DIM), w_out.dtype
                        ).at[:, :OUTPUT_DIM].set(w_out)
    b_out_p = jnp.zeros((1, PADDED_OUTPUT_DIM), b_out.dtype
                        ).at[:, :OUTPUT_DIM].set(b_out)
    return (w_in, b_in, w1, b1, w2, b2, w_out_p, b_out_p)


def reference_forward(x, params):
    """Pure-JAX reference with identical bf16-in / f32-accumulate math."""
    (w_in, b_in, w1, b1, w2, b2, w_out, b_out) = params

    def mm(a, w):
        return jnp.dot(a.astype(jnp.bfloat16), w, preferred_element_type=jnp.float32)

    h = jnp.maximum(mm(x, w_in) + b_in, 0.0)
    for i in range(NUM_BLOCKS):
        out = jnp.maximum(mm(h, w1[i]) + b1[i], 0.0)
        out = mm(out, w2[i]) + b2[i]
        h = jnp.maximum(out + h, 0.0)
    return mm(h, w_out) + b_out


if __name__ == "__main__":
    key = jax.random.PRNGKey(0)
    k_x, k_p = jax.random.split(key)

    B = 300  # non-multiple of the tile: exercises boundary-block clipping + a 2-tile grid
    x = jax.random.normal(k_x, (B, INPUT_DIM), jnp.float32)
    params = init_params(k_p)
    prepared = prepare_params(params)           # once, off the hot path

    y = mlp_backbone(x, prepared)               # auto tile -> grid=(2,), one tile per v7x core
    y = jax.block_until_ready(y)

    y_ref = reference_forward(x, params)
    assert y.shape == (B, OUTPUT_DIM)
    max_err = float(jnp.max(jnp.abs(y - y_ref)))
    assert jnp.allclose(y, y_ref, atol=2e-3, rtol=2e-3), max_err

    print("KERNEL_OK")
</pallas_src>

<mosaic_0001>
module attributes {stable_mosaic.version = 11 : i64} {
  func.func @mlp_backbone_kernel(%arg0: i32, %arg1: memref<152x69xf32, #tpu.memory_space<vmem>>, %arg2: memref<69x128xbf16, #tpu.memory_space<vmem>>, %arg3: memref<1x128xf32, #tpu.memory_space<vmem>>, %arg4: memref<4x128x128xbf16, #tpu.memory_space<vmem>>, %arg5: memref<4x1x128xf32, #tpu.memory_space<vmem>>, %arg6: memref<4x128x128xbf16, #tpu.memory_space<vmem>>, %arg7: memref<4x1x128xf32, #tpu.memory_space<vmem>>, %arg8: memref<128x128xbf16, #tpu.memory_space<vmem>>, %arg9: memref<1x128xf32, #tpu.memory_space<vmem>>, %arg10: memref<152x128xf32, #tpu.memory_space<vmem>>) attributes {dimension_semantics = [#tpu.dimension_semantics<parallel>], iteration_bounds = array<i64: 2>, scalar_prefetch = 0 : i64, scratch_operands = 0 : i64, tpu.core_type = #tpu.core_type<tc>, window_params = [{transform_indices = @transform_0, window_bounds = array<i64: 152, 69>}, {pipeline_mode = #tpu.pipeline_mode<synchronous>, transform_indices = @transform_1, window_bounds = array<i64: 69, 128>}, {pipeline_mode = #tpu.pipeline_mode<synchronous>, transform_indices = @transform_2, window_bounds = array<i64: 1, 128>}, {pipeline_mode = #tpu.pipeline_mode<synchronous>, transform_indices = @transform_3, window_bounds = array<i64: 4, 128, 128>}, {pipeline_mode = #tpu.pipeline_mode<synchronous>, transform_indices = @transform_4, window_bounds = array<i64: 4, 1, 128>}, {pipeline_mode = #tpu.pipeline_mode<synchronous>, transform_indices = @transform_5, window_bounds = array<i64: 4, 128, 128>}, {pipeline_mode = #tpu.pipeline_mode<synchronous>, transform_indices = @transform_6, window_bounds = array<i64: 4, 1, 128>}, {pipeline_mode = #tpu.pipeline_mode<synchronous>, transform_indices = @transform_7, window_bounds = array<i64: 128, 128>}, {pipeline_mode = #tpu.pipeline_mode<synchronous>, transform_indices = @transform_8, window_bounds = array<i64: 1, 128>}, {transform_indices = @transform_9, window_bounds = array<i64: 152, 128>}]} {
    %c0 = arith.constant 0 : index
    %c0_0 = arith.constant 0 : index
    %0 = vector.load %arg1[%c0, %c0_0] : memref<152x69xf32, #tpu.memory_space<vmem>>, vector<152x69xf32>
    %1 = arith.truncf %0 : vector<152x69xf32> to vector<152x69xbf16>
    %c0_1 = arith.constant 0 : index
    %c0_2 = arith.constant 0 : index
    %2 = vector.load %arg2[%c0_1, %c0_2] : memref<69x128xbf16, #tpu.memory_space<vmem>>, vector<69x128xbf16>
    %cst = arith.constant dense<0.000000e+00> : vector<152x128xf32>
    %3 = tpu.matmul %1, %2, %cst {dimension_numbers = #tpu.dot_dimension_numbers<[1], [0], [0], [1], [0, 0, 1, 1], [], []>} : vector<152x69xbf16>, vector<69x128xbf16>, vector<152x128xf32> -> vector<152x128xf32>
    %c0_3 = arith.constant 0 : index
    %c0_4 = arith.constant 0 : index
    %4 = vector.load %arg3[%c0_3, %c0_4] : memref<1x128xf32, #tpu.memory_space<vmem>>, vector<1x128xf32>
    %5 = vector.broadcast %4 : vector<1x128xf32> to vector<152x128xf32>
    %6 = arith.addf %3, %5 : vector<152x128xf32>
    %cst_5 = arith.constant 0.000000e+00 : f32
    %7 = vector.broadcast %cst_5 : f32 to vector<152x128xf32>
    %8 = arith.maximumf %6, %7 : vector<152x128xf32>
    %9 = arith.truncf %8 : vector<152x128xf32> to vector<152x128xbf16>
    %c0_6 = arith.constant 0 : index
    %c0_7 = arith.constant 0 : index
    %c0_8 = arith.constant 0 : index
    %10 = vector.load %arg4[%c0_6, %c0_7, %c0_8] : memref<4x128x128xbf16, #tpu.memory_space<vmem>>, vector<1x128x128xbf16>
    %11 = vector.shape_cast %10 : vector<1x128x128xbf16> to vector<128x128xbf16>
    %cst_9 = arith.constant dense<0.000000e+00> : vector<152x128xf32>
    %12 = tpu.matmul %9, %11, %cst_9 {dimension_numbers = #tpu.dot_dimension_numbers<[1], [0], [0], [1], [0, 0, 1, 1], [], []>} : vector<152x128xbf16>, vector<128x128xbf16>, vector<152x128xf32> -> vector<152x128xf32>
    %c0_10 = arith.constant 0 : index
    %c0_11 = arith.constant 0 : index
    %c0_12 = arith.constant 0 : index
    %13 = vector.load %arg5[%c0_10, %c0_11, %c0_12] : memref<4x1x128xf32, #tpu.memory_space<vmem>>, vector<1x1x128xf32>
    %14 = vector.shape_cast %13 : vector<1x1x128xf32> to vector<1x128xf32>
    %15 = vector.broadcast %14 : vector<1x128xf32> to vector<152x128xf32>
    %16 = arith.addf %12, %15 : vector<152x128xf32>
    %cst_13 = arith.constant 0.000000e+00 : f32
    %17 = vector.broadcast %cst_13 : f32 to vector<152x128xf32>
    %18 = arith.maximumf %16, %17 : vector<152x128xf32>
    %19 = arith.truncf %18 : vector<152x128xf32> to vector<152x128xbf16>
    %c0_14 = arith.constant 0 : index
    %c0_15 = arith.constant 0 : index
    %c0_16 = arith.constant 0 : index
    %20 = vector.load %arg6[%c0_14, %c0_15, %c0_16] : memref<4x128x128xbf16, #tpu.memory_space<vmem>>, vector<1x128x128xbf16>
    %21 = vector.shape_cast %20 : vector<1x128x128xbf16> to vector<128x128xbf16>
    %cst_17 = arith.constant dense<0.000000e+00> : vector<152x128xf32>
    %22 = tpu.matmul %19, %21, %cst_17 {dimension_numbers = #tpu.dot_dimension_numbers<[1], [0], [0], [1], [0, 0, 1, 1], [], []>} : vector<152x128xbf16>, vector<128x128xbf16>, vector<152x128xf32> -> vector<152x128xf32>
    %c0_18 = arith.constant 0 : index
    %c0_19 = arith.constant 0 : index
    %c0_20 = arith.constant 0 : index
    %23 = vector.load %arg7[%c0_18, %c0_19, %c0_20] : memref<4x1x128xf32, #tpu.memory_space<vmem>>, vector<1x1x128xf32>
    %24 = vector.shape_cast %23 : vector<1x1x128xf32> to vector<1x128xf32>
    %25 = vector.broadcast %24 : vector<1x128xf32> to vector<152x128xf32>
    %26 = arith.addf %22, %25 : vector<152x128xf32>
    %27 = arith.addf %26, %8 : vector<152x128xf32>
    %cst_21 = arith.constant 0.000000e+00 : f32
    %28 = vector.broadcast %cst_21 : f32 to vector<152x128xf32>
    %29 = arith.maximumf %27, %28 : vector<152x128xf32>
    %30 = arith.truncf %29 : vector<152x128xf32> to vector<152x128xbf16>
    %c1 = arith.constant 1 : index
    %c0_22 = arith.constant 0 : index
    %c0_23 = arith.constant 0 : index
    %31 = vector.load %arg4[%c1, %c0_22, %c0_23] : memref<4x128x128xbf16, #tpu.memory_space<vmem>>, vector<1x128x128xbf16>
    %32 = vector.shape_cast %31 : vector<1x128x128xbf16> to vector<128x128xbf16>
    %cst_24 = arith.constant dense<0.000000e+00> : vector<152x128xf32>
    %33 = tpu.matmul %30, %32, %cst_24 {dimension_numbers = #tpu.dot_dimension_numbers<[1], [0], [0], [1], [0, 0, 1, 1], [], []>} : vector<152x128xbf16>, vector<128x128xbf16>, vector<152x128xf32> -> vector<152x128xf32>
    %c1_25 = arith.constant 1 : index
    %c0_26 = arith.constant 0 : index
    %c0_27 = arith.constant 0 : index
    %34 = vector.load %arg5[%c1_25, %c0_26, %c0_27] : memref<4x1x128xf32, #tpu.memory_space<vmem>>, vector<1x1x128xf32>
    %35 = vector.shape_cast %34 : vector<1x1x128xf32> to vector<1x128xf32>
    %36 = vector.broadcast %35 : vector<1x128xf32> to vector<152x128xf32>
    %37 = arith.addf %33, %36 : vector<152x128xf32>
    %cst_28 = arith.constant 0.000000e+00 : f32
    %38 = vector.broadcast %cst_28 : f32 to vector<152x128xf32>
    %39 = arith.maximumf %37, %38 : vector<152x128xf32>
    %40 = arith.truncf %39 : vector<152x128xf32> to vector<152x128xbf16>
    %c1_29 = arith.constant 1 : index
    %c0_30 = arith.constant 0 : index
    %c0_31 = arith.constant 0 : index
    %41 = vector.load %arg6[%c1_29, %c0_30, %c0_31] : memref<4x128x128xbf16, #tpu.memory_space<vmem>>, vector<1x128x128xbf16>
    %42 = vector.shape_cast %41 : vector<1x128x128xbf16> to vector<128x128xbf16>
    %cst_32 = arith.constant dense<0.000000e+00> : vector<152x128xf32>
    %43 = tpu.matmul %40, %42, %cst_32 {dimension_numbers = #tpu.dot_dimension_numbers<[1], [0], [0], [1], [0, 0, 1, 1], [], []>} : vector<152x128xbf16>, vector<128x128xbf16>, vector<152x128xf32> -> vector<152x128xf32>
    %c1_33 = arith.constant 1 : index
    %c0_34 = arith.constant 0 : index
    %c0_35 = arith.constant 0 : index
    %44 = vector.load %arg7[%c1_33, %c0_34, %c0_35] : memref<4x1x128xf32, #tpu.memory_space<vmem>>, vector<1x1x128xf32>
    %45 = vector.shape_cast %44 : vector<1x1x128xf32> to vector<1x128xf32>
    %46 = vector.broadcast %45 : vector<1x128xf32> to vector<152x128xf32>
    %47 = arith.addf %43, %46 : vector<152x128xf32>
    %48 = arith.addf %47, %29 : vector<152x128xf32>
    %cst_36 = arith.constant 0.000000e+00 : f32
    %49 = vector.broadcast %cst_36 : f32 to vector<152x128xf32>
    %50 = arith.maximumf %48, %49 : vector<152x128xf32>
    %51 = arith.truncf %50 : vector<152x128xf32> to vector<152x128xbf16>
    %c2 = arith.constant 2 : index
    %c0_37 = arith.constant 0 : index
    %c0_38 = arith.constant 0 : index
    %52 = vector.load %arg4[%c2, %c0_37, %c0_38] : memref<4x128x128xbf16, #tpu.memory_space<vmem>>, vector<1x128x128xbf16>
    %53 = vector.shape_cast %52 : vector<1x128x128xbf16> to vector<128x128xbf16>
    %cst_39 = arith.constant dense<0.000000e+00> : vector<152x128xf32>
    %54 = tpu.matmul %51, %53, %cst_39 {dimension_numbers = #tpu.dot_dimension_numbers<[1], [0], [0], [1], [0, 0, 1, 1], [], []>} : vector<152x128xbf16>, vector<128x128xbf16>, vector<152x128xf32> -> vector<152x128xf32>
    %c2_40 = arith.constant 2 : index
    %c0_41 = arith.constant 0 : index
    %c0_42 = arith.constant 0 : index
    %55 = vector.load %arg5[%c2_40, %c0_41, %c0_42] : memref<4x1x128xf32, #tpu.memory_space<vmem>>, vector<1x1x128xf32>
    %56 = vector.shape_cast %55 : vector<1x1x128xf32> to vector<1x128xf32>
    %57 = vector.broadcast %56 : vector<1x128xf32> to vector<152x128xf32>
    %58 = arith.addf %54, %57 : vector<152x128xf32>
    %cst_43 = arith.constant 0.000000e+00 : f32
    %59 = vector.broadcast %cst_43 : f32 to vector<152x128xf32>
    %60 = arith.maximumf %58, %59 : vector<152x128xf32>
    %61 = arith.truncf %60 : vector<152x128xf32> to vector<152x128xbf16>
    %c2_44 = arith.constant 2 : index
    %c0_45 = arith.constant 0 : index
    %c0_46 = arith.constant 0 : index
    %62 = vector.load %arg6[%c2_44, %c0_45, %c0_46] : memref<4x128x128xbf16, #tpu.memory_space<vmem>>, vector<1x128x128xbf16>
    %63 = vector.shape_cast %62 : vector<1x128x128xbf16> to vector<128x128xbf16>
    %cst_47 = arith.constant dense<0.000000e+00> : vector<152x128xf32>
    %64 = tpu.matmul %61, %63, %cst_47 {dimension_numbers = #tpu.dot_dimension_numbers<[1], [0], [0], [1], [0, 0, 1, 1], [], []>} : vector<152x128xbf16>, vector<128x128xbf16>, vector<152x128xf32> -> vector<152x128xf32>
    %c2_48 = arith.constant 2 : index
    %c0_49 = arith.constant 0 : index
    %c0_50 = arith.constant 0 : index
    %65 = vector.load %arg7[%c2_48, %c0_49, %c0_50] : memref<4x1x128xf32, #tpu.memory_space<vmem>>, vector<1x1x128xf32>
    %66 = vector.shape_cast %65 : vector<1x1x128xf32> to vector<1x128xf32>
    %67 = vector.broadcast %66 : vector<1x128xf32> to vector<152x128xf32>
    %68 = arith.addf %64, %67 : vector<152x128xf32>
    %69 = arith.addf %68, %50 : vector<152x128xf32>
    %cst_51 = arith.constant 0.000000e+00 : f32
    %70 = vector.broadcast %cst_51 : f32 to vector<152x128xf32>
    %71 = arith.maximumf %69, %70 : vector<152x128xf32>
    %72 = arith.truncf %71 : vector<152x128xf32> to vector<152x128xbf16>
    %c3 = arith.constant 3 : index
    %c0_52 = arith.constant 0 : index
    %c0_53 = arith.constant 0 : index
    %73 = vector.load %arg4[%c3, %c0_52, %c0_53] : memref<4x128x128xbf16, #tpu.memory_space<vmem>>, vector<1x128x128xbf16>
    %74 = vector.shape_cast %73 : vector<1x128x128xbf16> to vector<128x128xbf16>
    %cst_54 = arith.constant dense<0.000000e+00> : vector<152x128xf32>
    %75 = tpu.matmul %72, %74, %cst_54 {dimension_numbers = #tpu.dot_dimension_numbers<[1], [0], [0], [1], [0, 0, 1, 1], [], []>} : vector<152x128xbf16>, vector<128x128xbf16>, vector<152x128xf32> -> vector<152x128xf32>
    %c3_55 = arith.constant 3 : index
    %c0_56 = arith.constant 0 : index
    %c0_57 = arith.constant 0 : index
    %76 = vector.load %arg5[%c3_55, %c0_56, %c0_57] : memref<4x1x128xf32, #tpu.memory_space<vmem>>, vector<1x1x128xf32>
    %77 = vector.shape_cast %76 : vector<1x1x128xf32> to vector<1x128xf32>
    %78 = vector.broadcast %77 : vector<1x128xf32> to vector<152x128xf32>
    %79 = arith.addf %75, %78 : vector<152x128xf32>
    %cst_58 = arith.constant 0.000000e+00 : f32
    %80 = vector.broadcast %cst_58 : f32 to vector<152x128xf32>
    %81 = arith.maximumf %79, %80 : vector<152x128xf32>
    %82 = arith.truncf %81 : vector<152x128xf32> to vector<152x128xbf16>
    %c3_59 = arith.constant 3 : index
    %c0_60 = arith.constant 0 : index
    %c0_61 = arith.constant 0 : index
    %83 = vector.load %arg6[%c3_59, %c0_60, %c0_61] : memref<4x128x128xbf16, #tpu.memory_space<vmem>>, vector<1x128x128xbf16>
    %84 = vector.shape_cast %83 : vector<1x128x128xbf16> to vector<128x128xbf16>
    %cst_62 = arith.constant dense<0.000000e+00> : vector<152x128xf32>
    %85 = tpu.matmul %82, %84, %cst_62 {dimension_numbers = #tpu.dot_dimension_numbers<[1], [0], [0], [1], [0, 0, 1, 1], [], []>} : vector<152x128xbf16>, vector<128x128xbf16>, vector<152x128xf32> -> vector<152x128xf32>
    %c3_63 = arith.constant 3 : index
    %c0_64 = arith.constant 0 : index
    %c0_65 = arith.constant 0 : index
    %86 = vector.load %arg7[%c3_63, %c0_64, %c0_65] : memref<4x1x128xf32, #tpu.memory_space<vmem>>, vector<1x1x128xf32>
    %87 = vector.shape_cast %86 : vector<1x1x128xf32> to vector<1x128xf32>
    %88 = vector.broadcast %87 : vector<1x128xf32> to vector<152x128xf32>
    %89 = arith.addf %85, %88 : vector<152x128xf32>
    %90 = arith.addf %89, %71 : vector<152x128xf32>
    %cst_66 = arith.constant 0.000000e+00 : f32
    %91 = vector.broadcast %cst_66 : f32 to vector<152x128xf32>
    %92 = arith.maximumf %90, %91 : vector<152x128xf32>
    %93 = arith.truncf %92 : vector<152x128xf32> to vector<152x128xbf16>
    %c0_67 = arith.constant 0 : index
    %c0_68 = arith.constant 0 : index
    %94 = vector.load %arg8[%c0_67, %c0_68] : memref<128x128xbf16, #tpu.memory_space<vmem>>, vector<128x128xbf16>
    %cst_69 = arith.constant dense<0.000000e+00> : vector<152x128xf32>
    %95 = tpu.matmul %93, %94, %cst_69 {dimension_numbers = #tpu.dot_dimension_numbers<[1], [0], [0], [1], [0, 0, 1, 1], [], []>} : vector<152x128xbf16>, vector<128x128xbf16>, vector<152x128xf32> -> vector<152x128xf32>
    %c0_70 = arith.constant 0 : index
    %c0_71 = arith.constant 0 : index
    %96 = vector.load %arg9[%c0_70, %c0_71] : memref<1x128xf32, #tpu.memory_space<vmem>>, vector<1x128xf32>
    %97 = vector.broadcast %96 : vector<1x128xf32> to vector<152x128xf32>
    %98 = arith.addf %95, %97 : vector<152x128xf32>
    %c0_72 = arith.constant 0 : index
    %c0_73 = arith.constant 0 : index
    %99 = vector.load %arg10[%c0_72, %c0_73] : memref<152x128xf32, #tpu.memory_space<vmem>>, vector<152x128xf32>
    tpu.vector_store %arg10[%c0_72, %c0_73], %98 {strides = array<i32>} : memref<152x128xf32, #tpu.memory_space<vmem>>, vector<152x128xf32>,
    return
  }
  func.func @transform_0(%arg0: i32) -> (i32, i32) {
    %c0_i32 = arith.constant 0 : i32
    %c0_i32_0 = arith.constant 0 : i32
    return %arg0, %c0_i32 : i32, i32
  }
  func.func @transform_1(%arg0: i32) -> (i32, i32) {
    %c0_i32 = arith.constant 0 : i32
    %c0_i32_0 = arith.constant 0 : i32
    %c0_i32_1 = arith.constant 0 : i32
    return %c0_i32, %c0_i32_0 : i32, i32
  }
  func.func @transform_2(%arg0: i32) -> (i32, i32) {
    %c0_i32 = arith.constant 0 : i32
    %c0_i32_0 = arith.constant 0 : i32
    %c0_i32_1 = arith.constant 0 : i32
    return %c0_i32, %c0_i32_0 : i32, i32
  }
  func.func @transform_3(%arg0: i32) -> (i32, i32, i32) {
    %c0_i32 = arith.constant 0 : i32
    %c0_i32_0 = arith.constant 0 : i32
    %c0_i32_1 = arith.constant 0 : i32
    %c0_i32_2 = arith.constant 0 : i32
    return %c0_i32, %c0_i32_0, %c0_i32_1 : i32, i32, i32
  }
  func.func @transform_4(%arg0: i32) -> (i32, i32, i32) {
    %c0_i32 = arith.constant 0 : i32
    %c0_i32_0 = arith.constant 0 : i32
    %c0_i32_1 = arith.constant 0 : i32
    %c0_i32_2 = arith.constant 0 : i32
    return %c0_i32, %c0_i32_0, %c0_i32_1 : i32, i32, i32
  }
  func.func @transform_5(%arg0: i32) -> (i32, i32, i32) {
    %c0_i32 = arith.constant 0 : i32
    %c0_i32_0 = arith.constant 0 : i32
    %c0_i32_1 = arith.constant 0 : i32
    %c0_i32_2 = arith.constant 0 : i32
    return %c0_i32, %c0_i32_0, %c0_i32_1 : i32, i32, i32
  }
  func.func @transform_6(%arg0: i32) -> (i32, i32, i32) {
    %c0_i32 = arith.constant 0 : i32
    %c0_i32_0 = arith.constant 0 : i32
    %c0_i32_1 = arith.constant 0 : i32
    %c0_i32_2 = arith.constant 0 : i32
    return %c0_i32, %c0_i32_0, %c0_i32_1 : i32, i32, i32
  }
  func.func @transform_7(%arg0: i32) -> (i32, i32) {
    %c0_i32 = arith.constant 0 : i32
    %c0_i32_0 = arith.constant 0 : i32
    %c0_i32_1 = arith.constant 0 : i32
    return %c0_i32, %c0_i32_0 : i32, i32
  }
  func.func @transform_8(%arg0: i32) -> (i32, i32) {
    %c0_i32 = arith.constant 0 : i32
    %c0_i32_0 = arith.constant 0 : i32
    %c0_i32_1 = arith.constant 0 : i32
    return %c0_i32, %c0_i32_0 : i32, i32
  }
  func.func @transform_9(%arg0: i32) -> (i32, i32) {
    %c0_i32 = arith.constant 0 : i32
    %c0_i32_0 = arith.constant 0 : i32
    return %arg0, %c0_i32 : i32, i32
  }
}

</mosaic_0001>

<llo_original>
// kernel: tpu_custom_call.1
$region0: #{tpu_custom_call.1}
  #allocation0 [shape = 'u32[]', space=smem, size = 0x4, offset = 0x4, fixed_abs, tag = 'smem constant byte address 0x4 - core index']
  #allocation1 [shape = 'u32[144,128]{1,0:T(1,128)}', space=vmem, size = 0x12000, scoped, tag = 'internal scratch']
  %s0 = inlined_call_operand.vmem [shape: f32[300,69], index: 0, kind: input, shape index: {}]
  %s1 = inlined_call_operand.hbm [shape: bf16[69,128], index: 1, kind: input, shape index: {}]
  %s2 = inlined_call_operand.vmem [shape: f32[1,128], index: 2, kind: input, shape index: {}]
  %s3 = inlined_call_operand.vmem [shape: bf16[4,128,128], index: 3, kind: input, shape index: {}]
  %s4 = inlined_call_operand.vmem [shape: f32[4,1,128], index: 4, kind: input, shape index: {}]
  %s5 = inlined_call_operand.vmem [shape: bf16[4,128,128], index: 5, kind: input, shape index: {}]
  %s6 = inlined_call_operand.vmem [shape: f32[4,1,128], index: 6, kind: input, shape index: {}]
  %s7 = inlined_call_operand.hbm [shape: bf16[128,128], index: 7, kind: input, shape index: {}]
  %s8 = inlined_call_operand.vmem [shape: f32[1,128], index: 8, kind: input, shape index: {}]
  %s9 = inlined_call_operand.hbm [shape: f32[300,128], index: 9, kind: output, shape index: {}]
  %s10 = sld [smem:[#allocation0]]
  $region77: #{tpu_custom_call.1} parent=0
    _
  %s12 = ssub.s32 1, %s10
  %s13 = scalar_select 0, %s12, %s10
  $region1: #{tpu_custom_call.1} parent=0
    #allocation2 [shape = 'u8[18432]{0}', space=vmem, size = 0x4800, scoped, tag = 'input window, operand 1, single buffered']
    #allocation3 [shape = 's32[2]{0}', space=sflag, size = 0x8, scoped, tag = 'scoped memory for tpu_custom_call.1']
    #allocation4 [shape = 's32[2]{0}', space=sflag, size = 0x8, scoped, tag = 'scoped memory for tpu_custom_call.1']
    #allocation5 [shape = 'u8[32768]{0}', space=vmem, size = 0x8000, scoped, tag = 'input window, operand 7, single buffered']
    #allocation6 [shape = 's32[1]{0}', space=sflag, size = 0x4, scoped, tag = 'scoped memory for tpu_custom_call.1']
    #allocation7 [shape = 'u8[155648]{0}', space=vmem, size = 0x26000, scoped, tag = 'output window, operand 0']
    %14 = vsyncpa [#allocation3], 0
    %15 = vsyncpa [#allocation6], 0
    %16 = vsyncpa [#allocation4], 0
    %s17 = scalar_lea.sflag [#allocation4], 1
    %18 = vsyncpa %s17, 0
    loop: start=0, step=1, limit=4
    $region2: #{tpu_custom_call.1} parent=1 // loop_pre_header
      _
    $region3: #{tpu_custom_call.1} parent=1 // loop_header
      %s20 = sphi 0, %s24
      %p21 = scmp.ge.s32.totalorder %s20, 4
      %s30 = sphi 0, %s32
      %s33 = sphi 0, %s30
      %s34 = sphi 0, %s33
      %s50 = sphi 0, %s34
      %s54 = sphi 0, %s54
      %s56 = sphi 0, %s54
      %s57 = sphi 0, %s56
      %s71 = sphi 0, %s57
      %s75 = sphi 0, %s75
      %s77 = sphi 0, %s75
      %s78 = sphi 0, %s77
      %s92 = sphi 0, %s78
      %s96 = sphi 0, %s96
      %s98 = sphi 0, %s96
      %s99 = sphi 0, %s98
      %s113 = sphi 0, %s99
      %s117 = sphi 0, %s117
      %s119 = sphi 0, %s117
      %s120 = sphi 0, %s119
      %s134 = sphi 0, %s120
      %s138 = sphi 0, %s138
      %s140 = sphi 0, %s138
      %s141 = sphi 0, %s140
      %s155 = sphi 0, %s141
      %s159 = sphi 0, %s159
      %s161 = sphi 0, %s159
      %s162 = sphi 0, %s161
      %s176 = sphi 0, %s162
      %s180 = sphi 0, %s180
      %s182 = sphi 0, %s180
      %s183 = sphi 0, %s182
      %s197 = sphi 0, %s183
      %s201 = sphi 0, %s201
      %s203 = sphi 0, %s201
      %s204 = sphi 0, %s203
      %s218 = sphi 0, %s204
      %s224 = sphi 0, %s226
      %s227 = sphi 0, %s224
      %s228 = sphi 0, %s227
      %s244 = sphi 0, %s228
    $region4: #{tpu_custom_call.1} parent=1 // loop_header_branch
      %23 = sbr.rel (%p21) target = $region8
    $region5: #{tpu_custom_call.1} parent=1 // loop_body
      %s25 = ssub.s32 %s20, 1
      %s26 = ssub.s32 %s20, 2
      %s27 = sadd.s32 %s20, 1
      %s28 = ssub.s32 %s20, %s27
      %p29 = scmp.eq.s32.totalorder %s28, 0
      %s31 = sadd.s32 %s30, 1
      %s32 = scalar_select %p29, %s30, %s31
      %p35 = pneg %p29
      %p36 = scmp.eq.s32.totalorder %s20, 1
      %p37 = por %p35, %p36
      %p38 = scmp.ne.s32.totalorder %s30, %s33
      %p39 = scmp.eq.s32.totalorder %s20, 0
      %p40 = por %p38, %p39
      %p41 = scmp.ne.s32.totalorder %s30, %s33
      %p42 = scmp.eq.s32.totalorder %s25, 1
      %p43 = por %p41, %p42
      %p44 = scmp.ne.s32.totalorder %s33, %s34
      %p45 = scmp.eq.s32.totalorder %s25, 0
      %p46 = por %p44, %p45
      %p47 = scmp.ne.s32.totalorder %s33, %s34
      %p48 = scmp.eq.s32.totalorder %s26, 1
      %p49 = por %p47, %p48
      %p51 = scmp.ne.s32.totalorder %s34, %s50
      %p52 = scmp.eq.s32.totalorder %s26, 0
      %p53 = por %p51, %p52
      %s55 = sadd.s32 %s54, 1
      %p58 = scmp.eq.s32.totalorder %s20, 1
      %p59 = scmp.ne.s32.totalorder %s54, %s56
      %p60 = scmp.eq.s32.totalorder %s20, 0
      %p61 = por %p59, %p60
      %p62 = scmp.ne.s32.totalorder %s54, %s56
      %p63 = scmp.eq.s32.totalorder %s25, 1
      %p64 = por %p62, %p63
      %p65 = scmp.ne.s32.totalorder %s56, %s57
      %p66 = scmp.eq.s32.totalorder %s25, 0
      %p67 = por %p65, %p66
      %p68 = scmp.ne.s32.totalorder %s56, %s57
      %p69 = scmp.eq.s32.totalorder %s26, 1
      %p70 = por %p68, %p69
      %p72 = scmp.ne.s32.totalorder %s57, %s71
      %p73 = scmp.eq.s32.totalorder %s26, 0
      %p74 = por %p72, %p73
      %s76 = sadd.s32 %s75, 1
      %p79 = scmp.eq.s32.totalorder %s20, 1
      %p80 = scmp.ne.s32.totalorder %s75, %s77
      %p81 = scmp.eq.s32.totalorder %s20, 0
      %p82 = por %p80, %p81
      %p83 = scmp.ne.s32.totalorder %s75, %s77
      %p84 = scmp.eq.s32.totalorder %s25, 1
      %p85 = por %p83, %p84
      %p86 = scmp.ne.s32.totalorder %s77, %s78
      %p87 = scmp.eq.s32.totalorder %s25, 0
      %p88 = por %p86, %p87
      %p89 = scmp.ne.s32.totalorder %s77, %s78
      %p90 = scmp.eq.s32.totalorder %s26, 1
      %p91 = por %p89, %p90
      %p93 = scmp.ne.s32.totalorder %s78, %s92
      %p94 = scmp.eq.s32.totalorder %s26, 0
      %p95 = por %p93, %p94
      %s97 = sadd.s32 %s96, 1
      %p100 = scmp.eq.s32.totalorder %s20, 1
      %p101 = scmp.ne.s32.totalorder %s96, %s98
      %p102 = scmp.eq.s32.totalorder %s20, 0
      %p103 = por %p101, %p102
      %p104 = scmp.ne.s32.totalorder %s96, %s98
      %p105 = scmp.eq.s32.totalorder %s25, 1
      %p106 = por %p104, %p105
      %p107 = scmp.ne.s32.totalorder %s98, %s99
      %p108 = scmp.eq.s32.totalorder %s25, 0
      %p109 = por %p107, %p108
      %p110 = scmp.ne.s32.totalorder %s98, %s99
      %p111 = scmp.eq.s32.totalorder %s26, 1
      %p112 = por %p110, %p111
      %p114 = scmp.ne.s32.totalorder %s99, %s113
      %p115 = scmp.eq.s32.totalorder %s26, 0
      %p116 = por %p114, %p115
      %s118 = sadd.s32 %s117, 1
      %p121 = scmp.eq.s32.totalorder %s20, 1
      %p122 = scmp.ne.s32.totalorder %s117, %s119
      %p123 = scmp.eq.s32.totalorder %s20, 0
      %p124 = por %p122, %p123
      %p125 = scmp.ne.s32.totalorder %s117, %s119
      %p126 = scmp.eq.s32.totalorder %s25, 1
      %p127 = por %p125, %p126
      %p128 = scmp.ne.s32.totalorder %s119, %s120
      %p129 = scmp.eq.s32.totalorder %s25, 0
      %p130 = por %p128, %p129
      %p131 = scmp.ne.s32.totalorder %s119, %s120
      %p132 = scmp.eq.s32.totalorder %s26, 1
      %p133 = por %p131, %p132
      %p135 = scmp.ne.s32.totalorder %s120, %s134
      %p136 = scmp.eq.s32.totalorder %s26, 0
      %p137 = por %p135, %p136
      %s139 = sadd.s32 %s138, 1
      %p142 = scmp.eq.s32.totalorder %s20, 1
      %p143 = scmp.ne.s32.totalorder %s138, %s140
      %p144 = scmp.eq.s32.totalorder %s20, 0
      %p145 = por %p143, %p144
      %p146 = scmp.ne.s32.totalorder %s138, %s140
      %p147 = scmp.eq.s32.totalorder %s25, 1
      %p148 = por %p146, %p147
      %p149 = scmp.ne.s32.totalorder %s140, %s141
      %p150 = scmp.eq.s32.totalorder %s25, 0
      %p151 = por %p149, %p150
      %p152 = scmp.ne.s32.totalorder %s140, %s141
      %p153 = scmp.eq.s32.totalorder %s26, 1
      %p154 = por %p152, %p153
      %p156 = scmp.ne.s32.totalorder %s141, %s155
      %p157 = scmp.eq.s32.totalorder %s26, 0
      %p158 = por %p156, %p157
      %s160 = sadd.s32 %s159, 1
      %p163 = scmp.eq.s32.totalorder %s20, 1
      %p164 = scmp.ne.s32.totalorder %s159, %s161
      %p165 = scmp.eq.s32.totalorder %s20, 0
      %p166 = por %p164, %p165
      %p167 = scmp.ne.s32.totalorder %s159, %s161
      %p168 = scmp.eq.s32.totalorder %s25, 1
      %p169 = por %p167, %p168
      %p170 = scmp.ne.s32.totalorder %s161, %s162
      %p171 = scmp.eq.s32.totalorder %s25, 0
      %p172 = por %p170, %p171
      %p173 = scmp.ne.s32.totalorder %s161, %s162
      %p174 = scmp.eq.s32.totalorder %s26, 1
      %p175 = por %p173, %p174
      %p177 = scmp.ne.s32.totalorder %s162, %s176
      %p178 = scmp.eq.s32.totalorder %s26, 0
      %p179 = por %p177, %p178
      %s181 = sadd.s32 %s180, 1
      %p184 = scmp.eq.s32.totalorder %s20, 1
      %p185 = scmp.ne.s32.totalorder %s180, %s182
      %p186 = scmp.eq.s32.totalorder %s20, 0
      %p187 = por %p185, %p186
      %p188 = scmp.ne.s32.totalorder %s180, %s182
      %p189 = scmp.eq.s32.totalorder %s25, 1
      %p190 = por %p188, %p189
      %p191 = scmp.ne.s32.totalorder %s182, %s183
      %p192 = scmp.eq.s32.totalorder %s25, 0
      %p193 = por %p191, %p192
      %p194 = scmp.ne.s32.totalorder %s182, %s183
      %p195 = scmp.eq.s32.totalorder %s26, 1
      %p196 = por %p194, %p195
      %p198 = scmp.ne.s32.totalorder %s183, %s197
      %p199 = scmp.eq.s32.totalorder %s26, 0
      %p200 = por %p198, %p199
      %s202 = sadd.s32 %s201, 1
      %p205 = scmp.eq.s32.totalorder %s20, 1
      %p206 = scmp.ne.s32.totalorder %s201, %s203
      %p207 = scmp.eq.s32.totalorder %s20, 0
      %p208 = por %p206, %p207
      %p209 = scmp.ne.s32.totalorder %s201, %s203
      %p210 = scmp.eq.s32.totalorder %s25, 1
      %p211 = por %p209, %p210
      %p212 = scmp.ne.s32.totalorder %s203, %s204
      %p213 = scmp.eq.s32.totalorder %s25, 0
      %p214 = por %p212, %p213
      %p215 = scmp.ne.s32.totalorder %s203, %s204
      %p216 = scmp.eq.s32.totalorder %s26, 1
      %p217 = por %p215, %p216
      %p219 = scmp.ne.s32.totalorder %s204, %s218
      %p220 = scmp.eq.s32.totalorder %s26, 0
      %p221 = por %p219, %p220
      %s222 = ssub.s32 %s20, %s27
      %p223 = scmp.eq.s32.totalorder %s222, 0
      %s225 = sadd.s32 %s224, 1
      %s226 = scalar_select %p223, %s224, %s225
      %p229 = pneg %p223
      %p230 = scmp.eq.s32.totalorder %s20, 1
      %p231 = por %p229, %p230
      %p232 = scmp.ne.s32.totalorder %s224, %s227
      %p233 = scmp.eq.s32.totalorder %s20, 0
      %p234 = por %p232, %p233
      %p235 = scmp.ne.s32.totalorder %s224, %s227
      %p236 = scmp.eq.s32.totalorder %s25, 1
      %p237 = por %p235, %p236
      %p238 = scmp.ne.s32.totalorder %s227, %s228
      %p239 = scmp.eq.s32.totalorder %s25, 0
      %p240 = por %p238, %p239
      %p241 = scmp.ne.s32.totalorder %s227, %s228
      %p242 = scmp.eq.s32.totalorder %s26, 1
      %p243 = por %p241, %p242
      %p245 = scmp.ne.s32.totalorder %s228, %s244
      %p246 = scmp.eq.s32.totalorder %s26, 0
      %p247 = por %p245, %p246
      %p248 = scmp.le.s32.totalorder 1, %s20
      %p249 = scmp.lt.s32.totalorder %s20, 3
      %p250 = pnand %p248, %p249
      %p251 = pneg %p250
      // Predicated region
      $region9: #{tpu_custom_call.1} parent=5 // pred_check
        _
      $region10: #{tpu_custom_call.1} parent=5 // pred_check_branch
        %253 = sbr.rel (%p250) target = $region12
      $region11: #{tpu_custom_call.1} parent=5 // pred_region
        %s254 = ssub.s32 %s20, 1
        // Predicated region
        $region13: #{tpu_custom_call.1} parent=11 // pred_check
          %p255 = pneg %p67
        $region14: #{tpu_custom_call.1} parent=11 // pred_check_branch
          %257 = sbr.rel (%p255) target = $region16
        $region15: #{tpu_custom_call.1} parent=11 // pred_region
          %s259 = ssub.s32 576, 576
          %260 = vsyncadd [#allocation3], %s259
          %s261 = sshll.u32 [#allocation2], 4
          %s262 = int_to_ptr.vmem [resolvable:$true] %s261
          %267 = dma.hbm_to_vmem [thread:$0]  %s1, 576, %s262, [#allocation3], 64, 64, 4
        $region16: #{tpu_custom_call.1} parent=11 // pred_fallthru
          _
        // Predicated region
        $region17: #{tpu_custom_call.1} parent=11 // pred_check
          %p268 = pneg %p88
        $region18: #{tpu_custom_call.1} parent=11 // pred_check_branch
          %270 = sbr.rel (%p268) target = $region20
        $region19: #{tpu_custom_call.1} parent=11 // pred_region
          _
        $region20: #{tpu_custom_call.1} parent=11 // pred_fallthru
          _
        // Predicated region
        $region21: #{tpu_custom_call.1} parent=11 // pred_check
          %p271 = pneg %p109
        $region22: #{tpu_custom_call.1} parent=11 // pred_check_branch
          %273 = sbr.rel (%p271) target = $region24
        $region23: #{tpu_custom_call.1} parent=11 // pred_region
          _
        $region24: #{tpu_custom_call.1} parent=11 // pred_fallthru
          _
        // Predicated region
        $region25: #{tpu_custom_call.1} parent=11 // pred_check
          %p274 = pneg %p130
        $region26: #{tpu_custom_call.1} parent=11 // pred_check_branch
          %276 = sbr.rel (%p274) target = $region28
        $region27: #{tpu_custom_call.1} parent=11 // pred_region
          _
        $region28: #{tpu_custom_call.1} parent=11 // pred_fallthru
          _
        // Predicated region
        $region29: #{tpu_custom_call.1} parent=11 // pred_check
          %p277 = pneg %p151
        $region30: #{tpu_custom_call.1} parent=11 // pred_check_branch
          %279 = sbr.rel (%p277) target = $region32
        $region31: #{tpu_custom_call.1} parent=11 // pred_region
          _
        $region32: #{tpu_custom_call.1} parent=11 // pred_fallthru
          _
        // Predicated region
        $region33: #{tpu_custom_call.1} parent=11 // pred_check
          %p280 = pneg %p172
        $region34: #{tpu_custom_call.1} parent=11 // pred_check_branch
          %282 = sbr.rel (%p280) target = $region36
        $region35: #{tpu_custom_call.1} parent=11 // pred_region
          _
        $region36: #{tpu_custom_call.1} parent=11 // pred_fallthru
          _
        // Predicated region
        $region37: #{tpu_custom_call.1} parent=11 // pred_check
          %p283 = pneg %p193
        $region38: #{tpu_custom_call.1} parent=11 // pred_check_branch
          %285 = sbr.rel (%p283) target = $region40
        $region39: #{tpu_custom_call.1} parent=11 // pred_region
          %s287 = ssub.s32 1024, 1024
          %288 = vsyncadd [#allocation6], %s287
          %s289 = sshll.u32 [#allocation5], 4
          %s290 = int_to_ptr.vmem [resolvable:$true] %s289
          %295 = dma.hbm_to_vmem [thread:$0]  %s7, 1024, %s290, [#allocation6], 64, 64, 4
        $region40: #{tpu_custom_call.1} parent=11 // pred_fallthru
          _
        // Predicated region
        $region41: #{tpu_custom_call.1} parent=11 // pred_check
          %p296 = pneg %p214
        $region42: #{tpu_custom_call.1} parent=11 // pred_check_branch
          %298 = sbr.rel (%p296) target = $region44
        $region43: #{tpu_custom_call.1} parent=11 // pred_region
          _
        $region44: #{tpu_custom_call.1} parent=11 // pred_fallthru
          _
      $region12: #{tpu_custom_call.1} parent=5 // pred_fallthru
        _
      %p299 = scmp.lt.s32.totalorder %s20, 2
      // Predicated region
      $region45: #{tpu_custom_call.1} parent=5 // pred_check
        %p300 = pneg %p299
      $region46: #{tpu_custom_call.1} parent=5 // pred_check_branch
        %302 = sbr.rel (%p300) target = $region48
      $region47: #{tpu_custom_call.1} parent=5 // pred_region
        // Predicated region
        $region49: #{tpu_custom_call.1} parent=47 // pred_check
          %p303 = pneg %p40
        $region50: #{tpu_custom_call.1} parent=47 // pred_check_branch
          %305 = sbr.rel (%p303) target = $region52
        $region51: #{tpu_custom_call.1} parent=47 // pred_region
          %s306 = smul.u32 19, %s20
          %p307 = scmp.lt.s32.totalorder %s306, 37
          %s308 = scalar_select %p307, %s306, 37
          %s309 = smul.addr %s308, 8
          %s310 = scalar_lea.vmem %s0, %s309
          %s311 = smul.u32 19, %s20
        $region52: #{tpu_custom_call.1} parent=47 // pred_fallthru
          _
      $region48: #{tpu_custom_call.1} parent=5 // pred_fallthru
        _
      %p312 = scmp.le.s32.totalorder 1, %s20
      %p313 = scmp.lt.s32.totalorder %s20, 3
      %p314 = pnand %p312, %p313
      %p315 = pneg %p314
      // Predicated region
      $region53: #{tpu_custom_call.1} parent=5 // pred_check
        _
      $region54: #{tpu_custom_call.1} parent=5 // pred_check_branch
        %317 = sbr.rel (%p314) target = $region56
      $region55: #{tpu_custom_call.1} parent=5 // pred_region
        %s318 = ssub.s32 %s20, 1
        // Predicated region
        $region57: #{tpu_custom_call.1} parent=55 // pred_check
          %p319 = pneg %p67
        $region58: #{tpu_custom_call.1} parent=55 // pred_check_branch
          %321 = sbr.rel (%p319) target = $region60
        $region59: #{tpu_custom_call.1} parent=55 // pred_region
          %322 = dma.done [#allocation3], 576
        $region60: #{tpu_custom_call.1} parent=55 // pred_fallthru
          _
        // Predicated region
        $region61: #{tpu_custom_call.1} parent=55 // pred_check
          %p323 = pneg %p193
        $region62: #{tpu_custom_call.1} parent=55 // pred_check_branch
          %325 = sbr.rel (%p323) target = $region64
        $region63: #{tpu_custom_call.1} parent=55 // pred_region
          %326 = dma.done [#allocation6], 1024
        $region64: #{tpu_custom_call.1} parent=55 // pred_fallthru
          _
        %s327 = smul.u32 19, %s25
        %p328 = scmp.lt.s32.totalorder %s327, 37
        %s329 = scalar_select %p328, %s327, 37
        %s330 = smul.addr %s329, 8
        %s331 = scalar_lea.vmem %s0, %s330
        %p332 = pneg %p46
        %p333 = pneg %p43
        %p334 = pneg %p67
        %p335 = pneg %p64
        %p336 = pneg %p88
        %p337 = pneg %p85
        %p338 = pneg %p109
        %p339 = pneg %p106
        %p340 = pneg %p130
        %p341 = pneg %p127
        %p342 = pneg %p151
        %p343 = pneg %p148
        %p344 = pneg %p172
        %p345 = pneg %p169
        %p346 = pneg %p193
        %p347 = pneg %p190
        %p348 = pneg %p214
        %p349 = pneg %p211
        %p350 = pneg %p240
        %p351 = pneg %p237
        %s352 = sand.u32 %s227, 1
        %s353 = scalar_lea.sflag [#allocation4], %s352
        %s354 = sand.u32 %s227, 1
        %s355 = smul.addr %s354, 152
        %s356 = scalar_lea.vmem [#allocation7], %s355
        %s357 = smul.u32 19, %s25
        %p358 = scmp.lt.s32.totalorder %s357, 37
        %s359 = scalar_select %p358, %s357, 37
        %s360 = smul.addr %s359, 8
        %s361 = scalar_lea.vmem %s0, %s360
        %s362 = smul.u32 19, %s25
        %s363 = smul.u32 19, %s25
        %v365 = vld [vmem:[%s361] sm:$0xff]
        %v366 = vld [vmem:[%s361 + $0x8] sm:$0xff]
        %v367 = vld [vmem:[%s361 + $0x10] sm:$0xff]
        %v368 = vld [vmem:[%s361 + $0x18] sm:$0xff]
        %v369 = vld [vmem:[%s361 + $0x20] sm:$0xff]
        %v370 = vld [vmem:[%s361 + $0x28] sm:$0xff]
        %v371 = vld [vmem:[%s361 + $0x30] sm:$0xff]
        %v372 = vld [vmem:[%s361 + $0x38] sm:$0xff]
        %v373 = vld [vmem:[%s361 + $0x40] sm:$0xff]
        %v374 = vld [vmem:[%s361 + $0x48] sm:$0xff]
        %v375 = vld [vmem:[%s361 + $0x50] sm:$0xff]
        %v376 = vld [vmem:[%s361 + $0x58] sm:$0xff]
        %v377 = vld [vmem:[%s361 + $0x60] sm:$0xff]
        %v378 = vld [vmem:[%s361 + $0x68] sm:$0xff]
        %v379 = vld [vmem:[%s361 + $0x70] sm:$0xff]
        %v380 = vld [vmem:[%s361 + $0x78] sm:$0xff]
        %v381 = vld [vmem:[%s361 + $0x80] sm:$0xff]
        %v382 = vld [vmem:[%s361 + $0x88] sm:$0xff]
        %v383 = vld [vmem:[%s361 + $0x90] sm:$0xff]
        %v384 = vpack.c.bf16 %v366, %v365
        %v385 = vpack.c.bf16 %v368, %v367
        %v386 = vpack.c.bf16 %v370, %v369
        %v387 = vpack.c.bf16 %v372, %v371
        %v388 = vpack.c.bf16 %v374, %v373
        %v389 = vpack.c.bf16 %v376, %v375
        %v390 = vpack.c.bf16 %v378, %v377
        %v391 = vpack.c.bf16 %v380, %v379
        %v392 = vpack.c.bf16 %v382, %v381
        %v393 = vpack.c.bf16 %v383, %v383
        %v394 = vld [vmem:[#allocation2] sm:$0xf]
        %v395 = vld [vmem:[#allocation2 + $0x4] sm:$0xf]
        %v396 = vld [vmem:[#allocation2 + $0x8] sm:$0xf]
        %v397 = vld [vmem:[#allocation2 + $0xc] sm:$0xf]
        %v398 = vld [vmem:[#allocation2 + $0x10] sm:$0xf]
        %v399 = vld [vmem:[#allocation2 + $0x14] sm:$0xf]
        %v400 = vld [vmem:[#allocation2 + $0x18] sm:$0xf]
        %v401 = vld [vmem:[#allocation2 + $0x1c] sm:$0xf]
        %v402 = vld [vmem:[#allocation2 + $0x20] sm:$0x7]
        %v403 = vld [vmem:[%s2] sm:$0x1]
        %v405 = vlaneseq
        %v406 = vshrl.u32 %v405, 7
        %v407 = vsub.s32 0, %v406
        %v408 = vrot.slane %v403, %v407
        %v419 = vunpack.c.l.b16 %v394
        %v420 = vunpack.c.l.b16 %v395
        %v421 = vunpack.c.l.b16 %v396
        %v422 = vunpack.c.l.b16 %v397
        %v423 = vunpack.c.l.b16 %v398
        %v424 = vunpack.c.l.b16 %v399
        %v425 = vunpack.c.l.b16 %v400
        %v426 = vunpack.c.l.b16 %v401
        %v427 = vunpack.c.l.b16 %v402
        %v428 = vpack.c.b16 %v420, %v419
        %v429 = vpack.c.b16 %v422, %v421
        %v430 = vpack.c.b16 %v424, %v423
        %v431 = vpack.c.b16 %v426, %v425
        %v432 = vpack.c.b16 %v427, %v427
        %vm437 = vcmask 564224
        %v439 = vsel %vm437, %v384, 0
        %v442 = vsel %vm437, %v385, 0
        %v445 = vsel %vm437, %v386, 0
        %v448 = vsel %vm437, %v387, 0
        %v451 = vsel %vm437, %v388, 0
        %v454 = vsel %vm437, %v389, 0
        %v457 = vsel %vm437, %v390, 0
        %v460 = vsel %vm437, %v391, 0
        %v463 = vsel %vm437, %v392, 0
        %v466 = vsel %vm437, %v393, 0
        %vm468 = vcmask 1041408
        %vm469 = vcmask 1042432
        %v470 = vsel %vm468, 4294967295, 65535
        %v471 = vsel %vm469, %v470, 0
        %v473 = vand.u32 %v432, %v471
        %475 = vmatprep.subr.bf16.mxu0 0
        %476 = vmatpush1.bf16.msra.mxu0 %v428
        %477 = vmatprep.subr.bf16.mxu0 0
        %478 = vmatpush1.bf16.msra.mxu0 %v429
        %479 = vmatprep.subr.bf16.mxu0 0
        %480 = vmatpush1.bf16.msra.mxu0 %v430
        %481 = vmatprep.subr.bf16.mxu0 0
        %482 = vmatpush1.bf16.msra.mxu0 %v431
        %483 = vmatprep.subr.bf16.mxu0 0
        %484 = vmatpush1.bf16.msra.mxu0 %v473
        %485 = vmatprep.subr.bf16.mxu0 0
        %486 = vmatpush1.bf16.msra.mxu0 0
        %487 = vmatprep.subr.bf16.mxu0 0
        %488 = vmatpush1.bf16.msra.mxu0 0
        %489 = vmatprep.subr.bf16.mxu0 0
        %490 = vmatpush1.bf16.msra.mxu0 0
        %491 = vmatprep.subr.bf16.mxu0 0
        %492 = vmatpush1.bf16.msra.mxu0 0
        %493 = vmatprep.subr.bf16.mxu0 0
        %494 = vmatpush1.bf16.msra.mxu0 0
        %495 = vmatprep.subr.bf16.mxu0 0
        %496 = vmatpush1.bf16.msra.mxu0 0
        %497 = vmatprep.subr.bf16.mxu0 0
        %498 = vmatpush1.bf16.msra.mxu0 0
        %499 = vmatprep.subr.bf16.mxu0 0
        %500 = vmatpush1.bf16.msra.mxu0 0
        %501 = vmatprep.subr.bf16.mxu0 0
        %502 = vmatpush1.bf16.msra.mxu0 0
        %503 = vmatprep.subr.bf16.mxu0 0
        %504 = vmatpush1.bf16.msra.mxu0 0
        %505 = vmatprep.subr.bf16.mxu0 0
        %506 = vmatpush1.bf16.msra.mxu0 0
        %507 = vmatprep.mubr.bf16.mxu0 0
        %508 = vmatmul.mubr.bf16.gmra.mrb[0].mxu0 %v439
        %v509 = vpop.f32.mrb[0].mxu0
        %v510 = vadd.f32 %v408, %v509
        %v511 = vpop.f32.mrb[0].mxu0
        %v512 = vpop.f32.mrb[0].mxu0
        %v513 = vadd.f32 %v408, %v512
        %v514 = vpop.f32.mrb[0].mxu0
        %515 = vmatprep.mubr.bf16.mxu0 0
        %516 = vmatmul.mubr.bf16.gmra.mrb[0].mxu0 %v442
        %v517 = vpop.f32.mrb[0].mxu0
        %v518 = vadd.f32 %v408, %v517
        %v519 = vpop.f32.mrb[0].mxu0
        %v520 = vpop.f32.mrb[0].mxu0
        %v521 = vadd.f32 %v408, %v520
        %v522 = vpop.f32.mrb[0].mxu0
        %523 = vmatprep.mubr.bf16.mxu0 0
        %524 = vmatmul.mubr.bf16.gmra.mrb[0].mxu0 %v445
        %v525 = vpop.f32.mrb[0].mxu0
        %v526 = vadd.f32 %v408, %v525
        %v527 = vpop.f32.mrb[0].mxu0
        %v528 = vpop.f32.mrb[0].mxu0
        %v529 = vadd.f32 %v408, %v528
        %v530 = vpop.f32.mrb[0].mxu0
        %531 = vmatprep.mubr.bf16.mxu0 0
        %532 = vmatmul.mubr.bf16.gmra.mrb[0].mxu0 %v448
        %v533 = vpop.f32.mrb[0].mxu0
        %v534 = vadd.f32 %v408, %v533
        %v535 = vpop.f32.mrb[0].mxu0
        %v536 = vpop.f32.mrb[0].mxu0
        %v537 = vadd.f32 %v408, %v536
        %v538 = vpop.f32.mrb[0].mxu0
        %539 = vmatprep.mubr.bf16.mxu0 0
        %540 = vmatmul.mubr.bf16.gmra.mrb[0].mxu0 %v451
        %v541 = vpop.f32.mrb[0].mxu0
        %v542 = vadd.f32 %v408, %v541
        %v543 = vpop.f32.mrb[0].mxu0
        %v544 = vpop.f32.mrb[0].mxu0
        %v545 = vadd.f32 %v408, %v544
        %v546 = vpop.f32.mrb[0].mxu0
        %547 = vmatprep.mubr.bf16.mxu0 0
        %548 = vmatmul.mubr.bf16.gmra.mrb[0].mxu0 %v454
        %v549 = vpop.f32.mrb[0].mxu0
        %v550 = vadd.f32 %v408, %v549
        %v551 = vpop.f32.mrb[0].mxu0
        %v552 = vpop.f32.mrb[0].mxu0
        %v553 = vadd.f32 %v408, %v552
        %v554 = vpop.f32.mrb[0].mxu0
        %555 = vmatprep.mubr.bf16.mxu0 0
        %556 = vmatmul.mubr.bf16.gmra.mrb[0].mxu0 %v457
        %v557 = vpop.f32.mrb[0].mxu0
        %v558 = vadd.f32 %v408, %v557
        %v559 = vpop.f32.mrb[0].mxu0
        %v560 = vpop.f32.mrb[0].mxu0
        %v561 = vadd.f32 %v408, %v560
        %v562 = vpop.f32.mrb[0].mxu0
        %563 = vmatprep.mubr.bf16.mxu0 0
        %564 = vmatmul.mubr.bf16.gmra.mrb[0].mxu0 %v460
        %v565 = vpop.f32.mrb[0].mxu0
        %v566 = vadd.f32 %v408, %v565
        %v567 = vpop.f32.mrb[0].mxu0
        %v568 = vpop.f32.mrb[0].mxu0
        %v569 = vadd.f32 %v408, %v568
        %v570 = vpop.f32.mrb[0].mxu0
        %571 = vmatprep.mubr.bf16.mxu0 0
        %572 = vmatmul.mubr.bf16.gmra.mrb[0].mxu0 %v463
        %v573 = vpop.f32.mrb[0].mxu0
        %v574 = vadd.f32 %v408, %v573
        %v575 = vpop.f32.mrb[0].mxu0
        %v576 = vpop.f32.mrb[0].mxu0
        %v577 = vadd.f32 %v408, %v576
        %v578 = vpop.f32.mrb[0].mxu0
        %579 = vmatprep.mubr.bf16.mxu0 0
        %580 = vmatmul.mubr.bf16.gmra.mrb[0].mxu0 %v466
        %v581 = vpop.f32.mrb[0].mxu0
        %v582 = vadd.f32 %v408, %v581
        %v583 = vpop.f32.mrb[0].mxu0
        %v584 = vpop.f32.mrb[0].mxu0
        %v585 = vpop.f32.mrb[0].mxu0
        %586 = vdwg.mxu0
        %v587 = vmax.f32 %v510, 0.0
        %v588 = vmax.f32 %v513, 0.0
        %v589 = vmax.f32 %v518, 0.0
        %v590 = vmax.f32 %v521, 0.0
        %v591 = vmax.f32 %v526, 0.0
        %v592 = vmax.f32 %v529, 0.0
        %v593 = vmax.f32 %v534, 0.0
        %v594 = vmax.f32 %v537, 0.0
        %v595 = vmax.f32 %v542, 0.0
        %v596 = vmax.f32 %v545, 0.0
        %v597 = vmax.f32 %v550, 0.0
        %v598 = vmax.f32 %v553, 0.0
        %v599 = vmax.f32 %v558, 0.0
        %v600 = vmax.f32 %v561, 0.0
        %v601 = vmax.f32 %v566, 0.0
        %v602 = vmax.f32 %v569, 0.0
        %v603 = vmax.f32 %v574, 0.0
        %v604 = vmax.f32 %v577, 0.0
        %v605 = vmax.f32 %v582, 0.0
        %v606 = vpack.c.bf16 %v588, %v587
        %v607 = vpack.c.bf16 %v590, %v589
        %v608 = vpack.c.bf16 %v592, %v591
        %v609 = vpack.c.bf16 %v594, %v593
        %v610 = vpack.c.bf16 %v596, %v595
        %v611 = vpack.c.bf16 %v598, %v597
        %v612 = vpack.c.bf16 %v600, %v599
        %v613 = vpack.c.bf16 %v602, %v601
        %v614 = vpack.c.bf16 %v604, %v603
        %v615 = vpack.c.bf16 %v605, %v605
        %v616 = vld [vmem:[%s3] sm:$0xf]
        %v617 = vld [vmem:[%s3 + $0x4] sm:$0xf]
        %v618 = vld [vmem:[%s3 + $0x8] sm:$0xf]
        %v619 = vld [vmem:[%s3 + $0xc] sm:$0xf]
        %v620 = vld [vmem:[%s3 + $0x10] sm:$0xf]
        %v621 = vld [vmem:[%s3 + $0x14] sm:$0xf]
        %v622 = vld [vmem:[%s3 + $0x18] sm:$0xf]
        %v623 = vld [vmem:[%s3 + $0x1c] sm:$0xf]
        %v624 = vld [vmem:[%s3 + $0x20] sm:$0xf]
        %v625 = vld [vmem:[%s3 + $0x24] sm:$0xf]
        %v626 = vld [vmem:[%s3 + $0x28] sm:$0xf]
        %v627 = vld [vmem:[%s3 + $0x2c] sm:$0xf]
        %v628 = vld [vmem:[%s3 + $0x30] sm:$0xf]
        %v629 = vld [vmem:[%s3 + $0x34] sm:$0xf]
        %v630 = vld [vmem:[%s3 + $0x38] sm:$0xf]
        %v631 = vld [vmem:[%s3 + $0x3c] sm:$0xf]
        %v632 = vld [vmem:[%s4] sm:$0x1]
        %v634 = vlaneseq
        %v635 = vshrl.u32 %v634, 7
        %v636 = vsub.s32 0, %v635
        %v637 = vrot.slane %v632, %v636
        %v655 = vunpack.c.l.b16 %v616
        %v656 = vunpack.c.l.b16 %v617
        %v657 = vunpack.c.l.b16 %v618
        %v658 = vunpack.c.l.b16 %v619
        %v659 = vunpack.c.l.b16 %v620
        %v660 = vunpack.c.l.b16 %v621
        %v661 = vunpack.c.l.b16 %v622
        %v662 = vunpack.c.l.b16 %v623
        %v663 = vunpack.c.l.b16 %v624
        %v664 = vunpack.c.l.b16 %v625
        %v665 = vunpack.c.l.b16 %v626
        %v666 = vunpack.c.l.b16 %v627
        %v667 = vunpack.c.l.b16 %v628
        %v668 = vunpack.c.l.b16 %v629
        %v669 = vunpack.c.l.b16 %v630
        %v670 = vunpack.c.l.b16 %v631
        %v671 = vpack.c.b16 %v656, %v655
        %v672 = vpack.c.b16 %v658, %v657
        %v673 = vpack.c.b16 %v660, %v659
        %v674 = vpack.c.b16 %v662, %v661
        %v675 = vpack.c.b16 %v664, %v663
        %v676 = vpack.c.b16 %v666, %v665
        %v677 = vpack.c.b16 %v668, %v667
        %v678 = vpack.c.b16 %v670, %v669
        %687 = vmatprep.subr.bf16.mxu0 0
        %688 = vmatpush1.bf16.msra.mxu0 %v671
        %689 = vmatprep.subr.bf16.mxu0 0
        %690 = vmatpush1.bf16.msra.mxu0 %v672
        %691 = vmatprep.subr.bf16.mxu0 0
        %692 = vmatpush1.bf16.msra.mxu0 %v673
        %693 = vmatprep.subr.bf16.mxu0 0
        %694 = vmatpush1.bf16.msra.mxu0 %v674
        %695 = vmatprep.subr.bf16.mxu0 0
        %696 = vmatpush1.bf16.msra.mxu0 %v675
        %697 = vmatprep.subr.bf16.mxu0 0
        %698 = vmatpush1.bf16.msra.mxu0 %v676
        %699 = vmatprep.subr.bf16.mxu0 0
        %700 = vmatpush1.bf16.msra.mxu0 %v677
        %701 = vmatprep.subr.bf16.mxu0 0
        %702 = vmatpush1.bf16.msra.mxu0 %v678
        %703 = vmatprep.subr.bf16.mxu0 0
        %704 = vmatpush1.bf16.msra.mxu0 0
        %705 = vmatprep.subr.bf16.mxu0 0
        %706 = vmatpush1.bf16.msra.mxu0 0
        %707 = vmatprep.subr.bf16.mxu0 0
        %708 = vmatpush1.bf16.msra.mxu0 0
        %709 = vmatprep.subr.bf16.mxu0 0
        %710 = vmatpush1.bf16.msra.mxu0 0
        %711 = vmatprep.subr.bf16.mxu0 0
        %712 = vmatpush1.bf16.msra.mxu0 0
        %713 = vmatprep.subr.bf16.mxu0 0
        %714 = vmatpush1.bf16.msra.mxu0 0
        %715 = vmatprep.subr.bf16.mxu0 0
        %716 = vmatpush1.bf16.msra.mxu0 0
        %717 = vmatprep.subr.bf16.mxu0 0
        %718 = vmatpush1.bf16.msra.mxu0 0
        %719 = vmatprep.mubr.bf16.mxu0 0
        %720 = vmatmul.mubr.bf16.gmra.mrb[0].mxu0 %v606
        %v721 = vpop.f32.mrb[0].mxu0
        %v722 = vadd.f32 %v637, %v721
        %v723 = vpop.f32.mrb[0].mxu0
        %v724 = vpop.f32.mrb[0].mxu0
        %v725 = vadd.f32 %v637, %v724
        %v726 = vpop.f32.mrb[0].mxu0
        %727 = vmatprep.mubr.bf16.mxu0 0
        %728 = vmatmul.mubr.bf16.gmra.mrb[0].mxu0 %v607
        %v729 = vpop.f32.mrb[0].mxu0
        %v730 = vadd.f32 %v637, %v729
        %v731 = vpop.f32.mrb[0].mxu0
        %v732 = vpop.f32.mrb[0].mxu0
        %v733 = vadd.f32 %v637, %v732
        %v734 = vpop.f32.mrb[0].mxu0
        %735 = vmatprep.mubr.bf16.mxu0 0
        %736 = vmatmul.mubr.bf16.gmra.mrb[0].mxu0 %v608
        %v737 = vpop.f32.mrb[0].mxu0
        %v738 = vadd.f32 %v637, %v737
        %v739 = vpop.f32.mrb[0].mxu0
        %v740 = vpop.f32.mrb[0].mxu0
        %v741 = vadd.f32 %v637, %v740
        %v742 = vpop.f32.mrb[0].mxu0
        %743 = vmatprep.mubr.bf16.mxu0 0
        %744 = vmatmul.mubr.bf16.gmra.mrb[0].mxu0 %v609
        %v745 = vpop.f32.mrb[0].mxu0
        %v746 = vadd.f32 %v637, %v745
        %v747 = vpop.f32.mrb[0].mxu0
        %v748 = vpop.f32.mrb[0].mxu0
        %v749 = vadd.f32 %v637, %v748
        %v750 = vpop.f32.mrb[0].mxu0
        %751 = vmatprep.mubr.bf16.mxu0 0
        %752 = vmatmul.mubr.bf16.gmra.mrb[0].mxu0 %v610
        %v753 = vpop.f32.mrb[0].mxu0
        %v754 = vadd.f32 %v637, %v753
        %v755 = vpop.f32.mrb[0].mxu0
        %v756 = vpop.f32.mrb[0].mxu0
        %v757 = vadd.f32 %v637, %v756
        %v758 = vpop.f32.mrb[0].mxu0
        %759 = vmatprep.mubr.bf16.mxu0 0
        %760 = vmatmul.mubr.bf16.gmra.mrb[0].mxu0 %v611
        %v761 = vpop.f32.mrb[0].mxu0
        %v762 = vadd.f32 %v637, %v761
        %v763 = vpop.f32.mrb[0].mxu0
        %v764 = vpop.f32.mrb[0].mxu0
        %v765 = vadd.f32 %v637, %v764
        %v766 = vpop.f32.mrb[0].mxu0
        %767 = vmatprep.mubr.bf16.mxu0 0
        %768 = vmatmul.mubr.bf16.gmra.mrb[0].mxu0 %v612
        %v769 = vpop.f32.mrb[0].mxu0
        %v770 = vadd.f32 %v637, %v769
        %v771 = vpop.f32.mrb[0].mxu0
        %v772 = vpop.f32.mrb[0].mxu0
        %v773 = vadd.f32 %v637, %v772
        %v774 = vpop.f32.mrb[0].mxu0
        %775 = vmatprep.mubr.bf16.mxu0 0
        %776 = vmatmul.mubr.bf16.gmra.mrb[0].mxu0 %v613
        %v777 = vpop.f32.mrb[0].mxu0
        %v778 = vadd.f32 %v637, %v777
        %v779 = vpop.f32.mrb[0].mxu0
        %v780 = vpop.f32.mrb[0].mxu0
        %v781 = vadd.f32 %v637, %v780
        %v782 = vpop.f32.mrb[0].mxu0
        %783 = vmatprep.mubr.bf16.mxu0 0
        %784 = vmatmul.mubr.bf16.gmra.mrb[0].mxu0 %v614
        %v785 = vpop.f32.mrb[0].mxu0
        %v786 = vadd.f32 %v637, %v785
        %v787 = vpop.f32.mrb[0].mxu0
        %v788 = vpop.f32.mrb[0].mxu0
        %v789 = vadd.f32 %v637, %v788
        %v790 = vpop.f32.mrb[0].mxu0
        %791 = vmatprep.mubr.bf16.mxu0 0
        %792 = vmatmul.mubr.bf16.gmra.mrb[0].mxu0 %v615
        %v793 = vpop.f32.mrb[0].mxu0
        %v794 = vadd.f32 %v637, %v793
        %v795 = vpop.f32.mrb[0].mxu0
        %v796 = vpop.f32.mrb[0].mxu0
        %v797 = vpop.f32.mrb[0].mxu0
        %798 = vdwg.mxu0
        %v799 = vmax.f32 %v722, 0.0
        %v800 = vmax.f32 %v725, 0.0
        %v801 = vmax.f32 %v730, 0.0
        %v802 = vmax.f32 %v733, 0.0
        %v803 = vmax.f32 %v738, 0.0
        %v804 = vmax.f32 %v741, 0.0
        %v805 = vmax.f32 %v746, 0.0
        %v806 = vmax.f32 %v749, 0.0
        %v807 = vmax.f32 %v754, 0.0
        %v808 = vmax.f32 %v757, 0.0
        %v809 = vmax.f32 %v762, 0.0
        %v810 = vmax.f32 %v765, 0.0
        %v811 = vmax.f32 %v770, 0.0
        %v812 = vmax.f32 %v773, 0.0
        %v813 = vmax.f32 %v778, 0.0
        %v814 = vmax.f32 %v781, 0.0
        %v815 = vmax.f32 %v786, 0.0
        %v816 = vmax.f32 %v789, 0.0
        %v817 = vmax.f32 %v794, 0.0
        %v818 = vpack.c.bf16 %v800, %v799
        %v819 = vpack.c.bf16 %v802, %v801
        %v820 = vpack.c.bf16 %v804, %v803
        %v821 = vpack.c.bf16 %v806, %v805
        %v822 = vpack.c.bf16 %v808, %v807
        %v823 = vpack.c.bf16 %v810, %v809
        %v824 = vpack.c.bf16 %v812, %v811
        %v825 = vpack.c.bf16 %v814, %v813
        %v826 = vpack.c.bf16 %v816, %v815
        %v827 = vpack.c.bf16 %v817, %v817
        %v828 = vld [vmem:[%s5] sm:$0xf]
        %v829 = vld [vmem:[%s5 + $0x4] sm:$0xf]
        %v830 = vld [vmem:[%s5 + $0x8] sm:$0xf]
        %v831 = vld [vmem:[%s5 + $0xc] sm:$0xf]
        %v832 = vld [vmem:[%s5 + $0x10] sm:$0xf]
        %v833 = vld [vmem:[%s5 + $0x14] sm:$0xf]
        %v834 = vld [vmem:[%s5 + $0x18] sm:$0xf]
        %v835 = vld [vmem:[%s5 + $0x1c] sm:$0xf]
        %v836 = vld [vmem:[%s5 + $0x20] sm:$0xf]
        %v837 = vld [vmem:[%s5 + $0x24] sm:$0xf]
        %v838 = vld [vmem:[%s5 + $0x28] sm:$0xf]
        %v839 = vld [vmem:[%s5 + $0x2c] sm:$0xf]
        %v840 = vld [vmem:[%s5 + $0x30] sm:$0xf]
        %v841 = vld [vmem:[%s5 + $0x34] sm:$0xf]
        %v842 = vld [vmem:[%s5 + $0x38] sm:$0xf]
        %v843 = vld [vmem:[%s5 + $0x3c] sm:$0xf]
        %v844 = vld [vmem:[%s6] sm:$0x1]
        %v846 = vlaneseq
        %v847 = vshrl.u32 %v846, 7
        %v848 = vsub.s32 0, %v847
        %v849 = vrot.slane %v844, %v848
        %v867 = vunpack.c.l.b16 %v828
        %v868 = vunpack.c.l.b16 %v829
        %v869 = vunpack.c.l.b16 %v830
        %v870 = vunpack.c.l.b16 %v831
        %v871 = vunpack.c.l.b16 %v832
        %v872 = vunpack.c.l.b16 %v833
        %v873 = vunpack.c.l.b16 %v834
        %v874 = vunpack.c.l.b16 %v835
        %v875 = vunpack.c.l.b16 %v836
        %v876 = vunpack.c.l.b16 %v837
        %v877 = vunpack.c.l.b16 %v838
        %v878 = vunpack.c.l.b16 %v839
        %v879 = vunpack.c.l.b16 %v840
        %v880 = vunpack.c.l.b16 %v841
        %v881 = vunpack.c.l.b16 %v842
        %v882 = vunpack.c.l.b16 %v843
        %v883 = vpack.c.b16 %v868, %v867
        %v884 = vpack.c.b16 %v870, %v869
        %v885 = vpack.c.b16 %v872, %v871
        %v886 = vpack.c.b16 %v874, %v873
        %v887 = vpack.c.b16 %v876, %v875
        %v888 = vpack.c.b16 %v878, %v877
        %v889 = vpack.c.b16 %v880, %v879
        %v890 = vpack.c.b16 %v882, %v881
        %899 = vmatprep.subr.bf16.mxu0 0
        %900 = vmatpush1.bf16.msra.mxu0 %v883
        %901 = vmatprep.subr.bf16.mxu0 0
        %902 = vmatpush1.bf16.msra.mxu0 %v884
        %903 = vmatprep.subr.bf16.mxu0 0
        %904 = vmatpush1.bf16.msra.mxu0 %v885
        %905 = vmatprep.subr.bf16.mxu0 0
        %906 = vmatpush1.bf16.msra.mxu0 %v886
        %907 = vmatprep.subr.bf16.mxu0 0
        %908 = vmatpush1.bf16.msra.mxu0 %v887
        %909 = vmatprep.subr.bf16.mxu0 0
        %910 = vmatpush1.bf16.msra.mxu0 %v888
        %911 = vmatprep.subr.bf16.mxu0 0
        %912 = vmatpush1.bf16.msra.mxu0 %v889
        %913 = vmatprep.subr.bf16.mxu0 0
        %914 = vmatpush1.bf16.msra.mxu0 %v890
        %915 = vmatprep.subr.bf16.mxu0 0
        %916 = vmatpush1.bf16.msra.mxu0 0
        %917 = vmatprep.subr.bf16.mxu0 0
        %918 = vmatpush1.bf16.msra.mxu0 0
        %919 = vmatprep.subr.bf16.mxu0 0
        %920 = vmatpush1.bf16.msra.mxu0 0
        %921 = vmatprep.subr.bf16.mxu0 0
        %922 = vmatpush1.bf16.msra.mxu0 0
        %923 = vmatprep.subr.bf16.mxu0 0
        %924 = vmatpush1.bf16.msra.mxu0 0
        %925 = vmatprep.subr.bf16.mxu0 0
        %926 = vmatpush1.bf16.msra.mxu0 0
        %927 = vmatprep.subr.bf16.mxu0 0
        %928 = vmatpush1.bf16.msra.mxu0 0
        %929 = vmatprep.subr.bf16.mxu0 0
        %930 = vmatpush1.bf16.msra.mxu0 0
        %931 = vmatprep.mubr.bf16.mxu0 0
        %932 = vmatmul.mubr.bf16.gmra.mrb[0].mxu0 %v818
        %v933 = vpop.f32.mrb[0].mxu0
        %v934 = vadd.f32 %v849, %v933
        %v935 = vpop.f32.mrb[0].mxu0
        %v936 = vpop.f32.mrb[0].mxu0
        %v937 = vadd.f32 %v849, %v936
        %v938 = vpop.f32.mrb[0].mxu0
        %939 = vmatprep.mubr.bf16.mxu0 0
        %940 = vmatmul.mubr.bf16.gmra.mrb[0].mxu0 %v819
        %v941 = vpop.f32.mrb[0].mxu0
        %v942 = vadd.f32 %v849, %v941
        %v943 = vpop.f32.mrb[0].mxu0
        %v944 = vpop.f32.mrb[0].mxu0
        %v945 = vadd.f32 %v849, %v944
        %v946 = vpop.f32.mrb[0].mxu0
        %947 = vmatprep.mubr.bf16.mxu0 0
        %948 = vmatmul.mubr.bf16.gmra.mrb[0].mxu0 %v820
        %v949 = vpop.f32.mrb[0].mxu0
        %v950 = vadd.f32 %v849, %v949
        %v951 = vpop.f32.mrb[0].mxu0
        %v952 = vpop.f32.mrb[0].mxu0
        %v953 = vadd.f32 %v849, %v952
        %v954 = vpop.f32.mrb[0].mxu0
        %955 = vmatprep.mubr.bf16.mxu0 0
        %956 = vmatmul.mubr.bf16.gmra.mrb[0].mxu0 %v821
        %v957 = vpop.f32.mrb[0].mxu0
        %v958 = vadd.f32 %v849, %v957
        %v959 = vpop.f32.mrb[0].mxu0
        %v960 = vpop.f32.mrb[0].mxu0
        %v961 = vadd.f32 %v849, %v960
        %v962 = vpop.f32.mrb[0].mxu0
        %963 = vmatprep.mubr.bf16.mxu0 0
        %964 = vmatmul.mubr.bf16.gmra.mrb[0].mxu0 %v822
        %v965 = vpop.f32.mrb[0].mxu0
        %v966 = vadd.f32 %v849, %v965
        %v967 = vpop.f32.mrb[0].mxu0
        %v968 = vpop.f32.mrb[0].mxu0
        %v969 = vadd.f32 %v849, %v968
        %v970 = vpop.f32.mrb[0].mxu0
        %971 = vmatprep.mubr.bf16.mxu0 0
        %972 = vmatmul.mubr.bf16.gmra.mrb[0].mxu0 %v823
        %v973 = vpop.f32.mrb[0].mxu0
        %v974 = vadd.f32 %v849, %v973
        %v975 = vpop.f32.mrb[0].mxu0
        %v976 = vpop.f32.mrb[0].mxu0
        %v977 = vadd.f32 %v849, %v976
        %v978 = vpop.f32.mrb[0].mxu0
        %979 = vmatprep.mubr.bf16.mxu0 0
        %980 = vmatmul.mubr.bf16.gmra.mrb[0].mxu0 %v824
        %v981 = vpop.f32.mrb[0].mxu0
        %v982 = vadd.f32 %v849, %v981
        %v983 = vpop.f32.mrb[0].mxu0
        %v984 = vpop.f32.mrb[0].mxu0
        %v985 = vadd.f32 %v849, %v984
        %v986 = vpop.f32.mrb[0].mxu0
        %987 = vmatprep.mubr.bf16.mxu0 0
        %988 = vmatmul.mubr.bf16.gmra.mrb[0].mxu0 %v825
        %v989 = vpop.f32.mrb[0].mxu0
        %v990 = vadd.f32 %v849, %v989
        %v991 = vpop.f32.mrb[0].mxu0
        %v992 = vpop.f32.mrb[0].mxu0
        %v993 = vadd.f32 %v849, %v992
        %v994 = vpop.f32.mrb[0].mxu0
        %995 = vmatprep.mubr.bf16.mxu0 0
        %996 = vmatmul.mubr.bf16.gmra.mrb[0].mxu0 %v826
        %v997 = vpop.f32.mrb[0].mxu0
        %v998 = vadd.f32 %v849, %v997
        %v999 = vpop.f32.mrb[0].mxu0
        %v1000 = vpop.f32.mrb[0].mxu0
        %v1001 = vadd.f32 %v849, %v1000
        %v1002 = vpop.f32.mrb[0].mxu0
        %1003 = vmatprep.mubr.bf16.mxu0 0
        %1004 = vmatmul.mubr.bf16.gmra.mrb[0].mxu0 %v827
        %v1005 = vpop.f32.mrb[0].mxu0
        %v1006 = vadd.f32 %v849, %v1005
        %v1007 = vpop.f32.mrb[0].mxu0
        %v1008 = vpop.f32.mrb[0].mxu0
        %v1009 = vpop.f32.mrb[0].mxu0
        %1010 = vdwg.mxu0
        %v1011 = vadd.f32 %v934, %v587
        %v1012 = vadd.f32 %v937, %v588
        %v1013 = vadd.f32 %v942, %v589
        %v1014 = vadd.f32 %v945, %v590
        %v1015 = vadd.f32 %v950, %v591
        %v1016 = vadd.f32 %v953, %v592
        %v1017 = vadd.f32 %v958, %v593
        %v1018 = vadd.f32 %v961, %v594
        %v1019 = vadd.f32 %v966, %v595
        %v1020 = vadd.f32 %v969, %v596
        %v1021 = vadd.f32 %v974, %v597
        %v1022 = vadd.f32 %v977, %v598
        %v1023 = vadd.f32 %v982, %v599
        %v1024 = vadd.f32 %v985, %v600
        %v1025 = vadd.f32 %v990, %v601
        %v1026 = vadd.f32 %v993, %v602
        %v1027 = vadd.f32 %v998, %v603
        %v1028 = vadd.f32 %v1001, %v604
        %v1029 = vadd.f32 %v1006, %v605
        %v1030 = vmax.f32 %v1011, 0.0
        %v1031 = vmax.f32 %v1012, 0.0
        %v1032 = vmax.f32 %v1013, 0.0
        %v1033 = vmax.f32 %v1014, 0.0
        %v1034 = vmax.f32 %v1015, 0.0
        %v1035 = vmax.f32 %v1016, 0.0
        %v1036 = vmax.f32 %v1017, 0.0
        %v1037 = vmax.f32 %v1018, 0.0
        %v1038 = vmax.f32 %v1019, 0.0
        %v1039 = vmax.f32 %v1020, 0.0
        %v1040 = vmax.f32 %v1021, 0.0
        %v1041 = vmax.f32 %v1022, 0.0
        %v1042 = vmax.f32 %v1023, 0.0
        %v1043 = vmax.f32 %v1024, 0.0
        %v1044 = vmax.f32 %v1025, 0.0
        %v1045 = vmax.f32 %v1026, 0.0
        %v1046 = vmax.f32 %v1027, 0.0
        %v1047 = vmax.f32 %v1028, 0.0
        %v1048 = vmax.f32 %v1029, 0.0
        %v1049 = vpack.c.bf16 %v1031, %v1030
        %v1050 = vpack.c.bf16 %v1033, %v1032
        %v1051 = vpack.c.bf16 %v1035, %v1034
        %v1052 = vpack.c.bf16 %v1037, %v1036
        %v1053 = vpack.c.bf16 %v1039, %v1038
        %v1054 = vpack.c.bf16 %v1041, %v1040
        %v1055 = vpack.c.bf16 %v1043, %v1042
        %v1056 = vpack.c.bf16 %v1045, %v1044
        %v1057 = vpack.c.bf16 %v1047, %v1046
        %v1058 = vpack.c.bf16 %v1048, %v1048
        %s1059 = scalar_lea.vmem %s3, 64
        %v1060 = vld [vmem:[%s1059] sm:$0xf]
        %v1061 = vld [vmem:[%s1059 + $0x4] sm:$0xf]
        %v1062 = vld [vmem:[%s1059 + $0x8] sm:$0xf]
        %v1063 = vld [vmem:[%s1059 + $0xc] sm:$0xf]
        %v1064 = vld [vmem:[%s1059 + $0x10] sm:$0xf]
        %v1065 = vld [vmem:[%s1059 + $0x14] sm:$0xf]
        %v1066 = vld [vmem:[%s1059 + $0x18] sm:$0xf]
        %v1067 = vld [vmem:[%s1059 + $0x1c] sm:$0xf]
        %v1068 = vld [vmem:[%s1059 + $0x20] sm:$0xf]
        %v1069 = vld [vmem:[%s1059 + $0x24] sm:$0xf]
        %v1070 = vld [vmem:[%s1059 + $0x28] sm:$0xf]
        %v1071 = vld [vmem:[%s1059 + $0x2c] sm:$0xf]
        %v1072 = vld [vmem:[%s1059 + $0x30] sm:$0xf]
        %v1073 = vld [vmem:[%s1059 + $0x34] sm:$0xf]
        %v1074 = vld [vmem:[%s1059 + $0x38] sm:$0xf]
        %v1075 = vld [vmem:[%s1059 + $0x3c] sm:$0xf]
        %s1076 = scalar_lea.vmem %s4, 1
        %v1077 = vld [vmem:[%s1076] sm:$0x1]
        %v1079 = vlaneseq
        %v1080 = vshrl.u32 %v1079, 7
        %v1081 = vsub.s32 0, %v1080
        %v1082 = vrot.slane %v1077, %v1081
        %v1100 = vunpack.c.l.b16 %v1060
        %v1101 = vunpack.c.l.b16 %v1061
        %v1102 = vunpack.c.l.b16 %v1062
        %v1103 = vunpack.c.l.b16 %v1063
        %v1104 = vunpack.c.l.b16 %v1064
        %v1105 = vunpack.c.l.b16 %v1065
        %v1106 = vunpack.c.l.b16 %v1066
        %v1107 = vunpack.c.l.b16 %v1067
        %v1108 = vunpack.c.l.b16 %v1068
        %v1109 = vunpack.c.l.b16 %v1069
        %v1110 = vunpack.c.l.b16 %v1070
        %v1111 = vunpack.c.l.b16 %v1071
        %v1112 = vunpack.c.l.b16 %v1072
        %v1113 = vunpack.c.l.b16 %v1073
        %v1114 = vunpack.c.l.b16 %v1074
        %v1115 = vunpack.c.l.b16 %v1075
        %v1116 = vpack.c.b16 %v1101, %v1100
        %v1117 = vpack.c.b16 %v1103, %v1102
        %v1118 = vpack.c.b16 %v1105, %v1104
        %v1119 = vpack.c.b16 %v1107, %v1106
        %v1120 = vpack.c.b16 %v1109, %v1108
        %v1121 = vpack.c.b16 %v1111, %v1110
        %v1122 = vpack.c.b16 %v1113, %v1112
        %v1123 = vpack.c.b16 %v1115, %v1114
        %1132 = vmatprep.subr.bf16.mxu0 0
        %1133 = vmatpush1.bf16.msra.mxu0 %v1116
        %1134 = vmatprep.subr.bf16.mxu0 0
        %1135 = vmatpush1.bf16.msra.mxu0 %v1117
        %1136 = vmatprep.subr.bf16.mxu0 0
        %1137 = vmatpush1.bf16.msra.mxu0 %v1118
        %1138 = vmatprep.subr.bf16.mxu0 0
        %1139 = vmatpush1.bf16.msra.mxu0 %v1119
        %1140 = vmatprep.subr.bf16.mxu0 0
        %1141 = vmatpush1.bf16.msra.mxu0 %v1120
        %1142 = vmatprep.subr.bf16.mxu0 0
        %1143 = vmatpush1.bf16.msra.mxu0 %v1121
        %1144 = vmatprep.subr.bf16.mxu0 0
        %1145 = vmatpush1.bf16.msra.mxu0 %v1122
        %1146 = vmatprep.subr.bf16.mxu0 0
        %1147 = vmatpush1.bf16.msra.mxu0 %v1123
        %1148 = vmatprep.subr.bf16.mxu0 0
        %1149 = vmatpush1.bf16.msra.mxu0 0
        %1150 = vmatprep.subr.bf16.mxu0 0
        %1151 = vmatpush1.bf16.msra.mxu0 0
        %1152 = vmatprep.subr.bf16.mxu0 0
        %1153 = vmatpush1.bf16.msra.mxu0 0
        %1154 = vmatprep.subr.bf16.mxu0 0
        %1155 = vmatpush1.bf16.msra.mxu0 0
        %1156 = vmatprep.subr.bf16.mxu0 0
        %1157 = vmatpush1.bf16.msra.mxu0 0
        %1158 = vmatprep.subr.bf16.mxu0 0
        %1159 = vmatpush1.bf16.msra.mxu0 0
        %1160 = vmatprep.subr.bf16.mxu0 0
        %1161 = vmatpush1.bf16.msra.mxu0 0
        %1162 = vmatprep.subr.bf16.mxu0 0
        %1163 = vmatpush1.bf16.msra.mxu0 0
        %1164 = vmatprep.mubr.bf16.mxu0 0
        %1165 = vmatmul.mubr.bf16.gmra.mrb[0].mxu0 %v1049
        %v1166 = vpop.f32.mrb[0].mxu0
        %v1167 = vadd.f32 %v1082, %v1166
        %v1168 = vpop.f32.mrb[0].mxu0
        %v1169 = vpop.f32.mrb[0].mxu0
        %v1170 = vadd.f32 %v1082, %v1169
        %v1171 = vpop.f32.mrb[0].mxu0
        %1172 = vmatprep.mubr.bf16.mxu0 0
        %1173 = vmatmul.mubr.bf16.gmra.mrb[0].mxu0 %v1050
        %v1174 = vpop.f32.mrb[0].mxu0
        %v1175 = vadd.f32 %v1082, %v1174
        %v1176 = vpop.f32.mrb[0].mxu0
        %v1177 = vpop.f32.mrb[0].mxu0
        %v1178 = vadd.f32 %v1082, %v1177
        %v1179 = vpop.f32.mrb[0].mxu0
        %1180 = vmatprep.mubr.bf16.mxu0 0
        %1181 = vmatmul.mubr.bf16.gmra.mrb[0].mxu0 %v1051
        %v1182 = vpop.f32.mrb[0].mxu0
        %v1183 = vadd.f32 %v1082, %v1182
        %v1184 = vpop.f32.mrb[0].mxu0
        %v1185 = vpop.f32.mrb[0].mxu0
        %v1186 = vadd.f32 %v1082, %v1185
        %v1187 = vpop.f32.mrb[0].mxu0
        %1188 = vmatprep.mubr.bf16.mxu0 0
        %1189 = vmatmul.mubr.bf16.gmra.mrb[0].mxu0 %v1052
        %v1190 = vpop.f32.mrb[0].mxu0
        %v1191 = vadd.f32 %v1082, %v1190
        %v1192 = vpop.f32.mrb[0].mxu0
        %v1193 = vpop.f32.mrb[0].mxu0
        %v1194 = vadd.f32 %v1082, %v1193
        %v1195 = vpop.f32.mrb[0].mxu0
        %1196 = vmatprep.mubr.bf16.mxu0 0
        %1197 = vmatmul.mubr.bf16.gmra.mrb[0].mxu0 %v1053
        %v1198 = vpop.f32.mrb[0].mxu0
        %v1199 = vadd.f32 %v1082, %v1198
        %v1200 = vpop.f32.mrb[0].mxu0
        %v1201 = vpop.f32.mrb[0].mxu0
        %v1202 = vadd.f32 %v1082, %v1201
        %v1203 = vpop.f32.mrb[0].mxu0
        %1204 = vmatprep.mubr.bf16.mxu0 0
        %1205 = vmatmul.mubr.bf16.gmra.mrb[0].mxu0 %v1054
        %v1206 = vpop.f32.mrb[0].mxu0
        %v1207 = vadd.f32 %v1082, %v1206
        %v1208 = vpop.f32.mrb[0].mxu0
        %v1209 = vpop.f32.mrb[0].mxu0
        %v1210 = vadd.f32 %v1082, %v1209
        %v1211 = vpop.f32.mrb[0].mxu0
        %1212 = vmatprep.mubr.bf16.mxu0 0
        %1213 = vmatmul.mubr.bf16.gmra.mrb[0].mxu0 %v1055
        %v1214 = vpop.f32.mrb[0].mxu0
        %v1215 = vadd.f32 %v1082, %v1214
        %v1216 = vpop.f32.mrb[0].mxu0
        %v1217 = vpop.f32.mrb[0].mxu0
        %v1218 = vadd.f32 %v1082, %v1217
        %v1219 = vpop.f32.mrb[0].mxu0
        %1220 = vmatprep.mubr.bf16.mxu0 0
        %1221 = vmatmul.mubr.bf16.gmra.mrb[0].mxu0 %v1056
        %v1222 = vpop.f32.mrb[0].mxu0
        %v1223 = vadd.f32 %v1082, %v1222
        %v1224 = vpop.f32.mrb[0].mxu0
        %v1225 = vpop.f32.mrb[0].mxu0
        %v1226 = vadd.f32 %v1082, %v1225
        %v1227 = vpop.f32.mrb[0].mxu0
        %1228 = vmatprep.mubr.bf16.mxu0 0
        %1229 = vmatmul.mubr.bf16.gmra.mrb[0].mxu0 %v1057
        %v1230 = vpop.f32.mrb[0].mxu0
        %v1231 = vadd.f32 %v1082, %v1230
        %v1232 = vpop.f32.mrb[0].mxu0
        %v1233 = vpop.f32.mrb[0].mxu0
        %v1234 = vadd.f32 %v1082, %v1233
        %v1235 = vpop.f32.mrb[0].mxu0
        %1236 = vmatprep.mubr.bf16.mxu0 0
        %1237 = vmatmul.mubr.bf16.gmra.mrb[0].mxu0 %v1058
        %v1238 = vpop.f32.mrb[0].mxu0
        %v1239 = vadd.f32 %v1082, %v1238
        %v1240 = vpop.f32.mrb[0].mxu0
        %v1241 = vpop.f32.mrb[0].mxu0
        %v1242 = vpop.f32.mrb[0].mxu0
        %1243 = vdwg.mxu0
        %v1244 = vmax.f32 %v1167, 0.0
        %v1245 = vmax.f32 %v1170, 0.0
        %v1246 = vmax.f32 %v1175, 0.0
        %v1247 = vmax.f32 %v1178, 0.0
        %v1248 = vmax.f32 %v1183, 0.0
        %v1249 = vmax.f32 %v1186, 0.0
        %v1250 = vmax.f32 %v1191, 0.0
        %v1251 = vmax.f32 %v1194, 0.0
        %v1252 = vmax.f32 %v1199, 0.0
        %v1253 = vmax.f32 %v1202, 0.0
        %v1254 = vmax.f32 %v1207, 0.0
        %v1255 = vmax.f32 %v1210, 0.0
        %v1256 = vmax.f32 %v1215, 0.0
        %v1257 = vmax.f32 %v1218, 0.0
        %v1258 = vmax.f32 %v1223, 0.0
        %v1259 = vmax.f32 %v1226, 0.0
        %v1260 = vmax.f32 %v1231, 0.0
        %v1261 = vmax.f32 %v1234, 0.0
        %v1262 = vmax.f32 %v1239, 0.0
        %v1263 = vpack.c.bf16 %v1245, %v1244
        %v1264 = vpack.c.bf16 %v1247, %v1246
        %v1265 = vpack.c.bf16 %v1249, %v1248
        %v1266 = vpack.c.bf16 %v1251, %v1250
        %v1267 = vpack.c.bf16 %v1253, %v1252
        %v1268 = vpack.c.bf16 %v1255, %v1254
        %v1269 = vpack.c.bf16 %v1257, %v1256
        %v1270 = vpack.c.bf16 %v1259, %v1258
        %v1271 = vpack.c.bf16 %v1261, %v1260
        %v1272 = vpack.c.bf16 %v1262, %v1262
        %s1273 = scalar_lea.vmem %s5, 64
        %v1274 = vld [vmem:[%s1273] sm:$0xf]
        %v1275 = vld [vmem:[%s1273 + $0x4] sm:$0xf]
        %v1276 = vld [vmem:[%s1273 + $0x8] sm:$0xf]
        %v1277 = vld [vmem:[%s1273 + $0xc] sm:$0xf]
        %v1278 = vld [vmem:[%s1273 + $0x10] sm:$0xf]
        %v1279 = vld [vmem:[%s1273 + $0x14] sm:$0xf]
        %v1280 = vld [vmem:[%s1273 + $0x18] sm:$0xf]
        %v1281 = vld [vmem:[%s1273 + $0x1c] sm:$0xf]
        %v1282 = vld [vmem:[%s1273 + $0x20] sm:$0xf]
        %v1283 = vld [vmem:[%s1273 + $0x24] sm:$0xf]
        %v1284 = vld [vmem:[%s1273 + $0x28] sm:$0xf]
        %v1285 = vld [vmem:[%s1273 + $0x2c] sm:$0xf]
        %v1286 = vld [vmem:[%s1273 + $0x30] sm:$0xf]
        %v1287 = vld [vmem:[%s1273 + $0x34] sm:$0xf]
        %v1288 = vld [vmem:[%s1273 + $0x38] sm:$0xf]
        %v1289 = vld [vmem:[%s1273 + $0x3c] sm:$0xf]
        %s1290 = scalar_lea.vmem %s6, 1
        %v1291 = vld [vmem:[%s1290] sm:$0x1]
        %v1293 = vlaneseq
        %v1294 = vshrl.u32 %v1293, 7
        %v1295 = vsub.s32 0, %v1294
        %v1296 = vrot.slane %v1291, %v1295
        %v1314 = vunpack.c.l.b16 %v1274
        %v1315 = vunpack.c.l.b16 %v1275
        %v1316 = vunpack.c.l.b16 %v1276
        %v1317 = vunpack.c.l.b16 %v1277
        %v1318 = vunpack.c.l.b16 %v1278
        %v1319 = vunpack.c.l.b16 %v1279
        %v1320 = vunpack.c.l.b16 %v1280
        %v1321 = vunpack.c.l.b16 %v1281
        %v1322 = vunpack.c.l.b16 %v1282
        %v1323 = vunpack.c.l.b16 %v1283
        %v1324 = vunpack.c.l.b16 %v1284
        %v1325 = vunpack.c.l.b16 %v1285
        %v1326 = vunpack.c.l.b16 %v1286
        %v1327 = vunpack.c.l.b16 %v1287
        %v1328 = vunpack.c.l.b16 %v1288
        %v1329 = vunpack.c.l.b16 %v1289
        %v1330 = vpack.c.b16 %v1315, %v1314
        %v1331 = vpack.c.b16 %v1317, %v1316
        %v1332 = vpack.c.b16 %v1319, %v1318
        %v1333 = vpack.c.b16 %v1321, %v1320
        %v1334 = vpack.c.b16 %v1323, %v1322
        %v1335 = vpack.c.b16 %v1325, %v1324
        %v1336 = vpack.c.b16 %v1327, %v1326
        %v1337 = vpack.c.b16 %v1329, %v1328
        %1346 = vmatprep.subr.bf16.mxu0 0
        %1347 = vmatpush1.bf16.msra.mxu0 %v1330
        %1348 = vmatprep.subr.bf16.mxu0 0
        %1349 = vmatpush1.bf16.msra.mxu0 %v1331
        %1350 = vmatprep.subr.bf16.mxu0 0
        %1351 = vmatpush1.bf16.msra.mxu0 %v1332
        %1352 = vmatprep.subr.bf16.mxu0 0
        %1353 = vmatpush1.bf16.msra.mxu0 %v1333
        %1354 = vmatprep.subr.bf16.mxu0 0
        %1355 = vmatpush1.bf16.msra.mxu0 %v1334
        %1356 = vmatprep.subr.bf16.mxu0 0
        %1357 = vmatpush1.bf16.msra.mxu0 %v1335
        %1358 = vmatprep.subr.bf16.mxu0 0
        %1359 = vmatpush1.bf16.msra.mxu0 %v1336
        %1360 = vmatprep.subr.bf16.mxu0 0
        %1361 = vmatpush1.bf16.msra.mxu0 %v1337
        %1362 = vmatprep.subr.bf16.mxu0 0
        %1363 = vmatpush1.bf16.msra.mxu0 0
        %1364 = vmatprep.subr.bf16.mxu0 0
        %1365 = vmatpush1.bf16.msra.mxu0 0
        %1366 = vmatprep.subr.bf16.mxu0 0
        %1367 = vmatpush1.bf16.msra.mxu0 0
        %1368 = vmatprep.subr.bf16.mxu0 0
        %1369 = vmatpush1.bf16.msra.mxu0 0
        %1370 = vmatprep.subr.bf16.mxu0 0
        %1371 = vmatpush1.bf16.msra.mxu0 0
        %1372 = vmatprep.subr.bf16.mxu0 0
        %1373 = vmatpush1.bf16.msra.mxu0 0
        %1374 = vmatprep.subr.bf16.mxu0 0
        %1375 = vmatpush1.bf16.msra.mxu0 0
        %1376 = vmatprep.subr.bf16.mxu0 0
        %1377 = vmatpush1.bf16.msra.mxu0 0
        %1378 = vmatprep.mubr.bf16.mxu0 0
        %1379 = vmatmul.mubr.bf16.gmra.mrb[0].mxu0 %v1263
        %v1380 = vpop.f32.mrb[0].mxu0
        %v1381 = vadd.f32 %v1296, %v1380
        %v1382 = vpop.f32.mrb[0].mxu0
        %v1383 = vpop.f32.mrb[0].mxu0
        %v1384 = vadd.f32 %v1296, %v1383
        %v1385 = vpop.f32.mrb[0].mxu0
        %1386 = vmatprep.mubr.bf16.mxu0 0
        %1387 = vmatmul.mubr.bf16.gmra.mrb[0].mxu0 %v1264
        %v1388 = vpop.f32.mrb[0].mxu0
        %v1389 = vadd.f32 %v1296, %v1388
        %v1390 = vpop.f32.mrb[0].mxu0
        %v1391 = vpop.f32.mrb[0].mxu0
        %v1392 = vadd.f32 %v1296, %v1391
        %v1393 = vpop.f32.mrb[0].mxu0
        %1394 = vmatprep.mubr.bf16.mxu0 0
        %1395 = vmatmul.mubr.bf16.gmra.mrb[0].mxu0 %v1265
        %v1396 = vpop.f32.mrb[0].mxu0
        %v1397 = vadd.f32 %v1296, %v1396
        %v1398 = vpop.f32.mrb[0].mxu0
        %v1399 = vpop.f32.mrb[0].mxu0
        %v1400 = vadd.f32 %v1296, %v1399
        %v1401 = vpop.f32.mrb[0].mxu0
        %1402 = vmatprep.mubr.bf16.mxu0 0
        %1403 = vmatmul.mubr.bf16.gmra.mrb[0].mxu0 %v1266
        %v1404 = vpop.f32.mrb[0].mxu0
        %v1405 = vadd.f32 %v1296, %v1404
        %v1406 = vpop.f32.mrb[0].mxu0
        %v1407 = vpop.f32.mrb[0].mxu0
        %v1408 = vadd.f32 %v1296, %v1407
        %v1409 = vpop.f32.mrb[0].mxu0
        %1410 = vmatprep.mubr.bf16.mxu0 0
        %1411 = vmatmul.mubr.bf16.gmra.mrb[0].mxu0 %v1267
        %v1412 = vpop.f32.mrb[0].mxu0
        %v1413 = vadd.f32 %v1296, %v1412
        %v1414 = vpop.f32.mrb[0].mxu0
        %v1415 = vpop.f32.mrb[0].mxu0
        %v1416 = vadd.f32 %v1296, %v1415
        %v1417 = vpop.f32.mrb[0].mxu0
        %1418 = vmatprep.mubr.bf16.mxu0 0
        %1419 = vmatmul.mubr.bf16.gmra.mrb[0].mxu0 %v1268
        %v1420 = vpop.f32.mrb[0].mxu0
        %v1421 = vadd.f32 %v1296, %v1420
        %v1422 = vpop.f32.mrb[0].mxu0
        %v1423 = vpop.f32.mrb[0].mxu0
        %v1424 = vadd.f32 %v1296, %v1423
        %v1425 = vpop.f32.mrb[0].mxu0
        %1426 = vmatprep.mubr.bf16.mxu0 0
        %1427 = vmatmul.mubr.bf16.gmra.mrb[0].mxu0 %v1269
        %v1428 = vpop.f32.mrb[0].mxu0
        %v1429 = vadd.f32 %v1296, %v1428
        %v1430 = vpop.f32.mrb[0].mxu0
        %v1431 = vpop.f32.mrb[0].mxu0
        %v1432 = vadd.f32 %v1296, %v1431
        %v1433 = vpop.f32.mrb[0].mxu0
        %1434 = vmatprep.mubr.bf16.mxu0 0
        %1435 = vmatmul.mubr.bf16.gmra.mrb[0].mxu0 %v1270
        %v1436 = vpop.f32.mrb[0].mxu0
        %v1437 = vadd.f32 %v1296, %v1436
        %v1438 = vpop.f32.mrb[0].mxu0
        %v1439 = vpop.f32.mrb[0].mxu0
        %v1440 = vadd.f32 %v1296, %v1439
        %v1441 = vpop.f32.mrb[0].mxu0
        %1442 = vmatprep.mubr.bf16.mxu0 0
        %1443 = vmatmul.mubr.bf16.gmra.mrb[0].mxu0 %v1271
        %v1444 = vpop.f32.mrb[0].mxu0
        %v1445 = vadd.f32 %v1296, %v1444
        %v1446 = vpop.f32.mrb[0].mxu0
        %v1447 = vpop.f32.mrb[0].mxu0
        %v1448 = vadd.f32 %v1296, %v1447
        %v1449 = vpop.f32.mrb[0].mxu0
        %1450 = vmatprep.mubr.bf16.mxu0 0
        %1451 = vmatmul.mubr.bf16.gmra.mrb[0].mxu0 %v1272
        %v1452 = vpop.f32.mrb[0].mxu0
        %v1453 = vadd.f32 %v1296, %v1452
        %v1454 = vpop.f32.mrb[0].mxu0
        %v1455 = vpop.f32.mrb[0].mxu0
        %v1456 = vpop.f32.mrb[0].mxu0
        %1457 = vdwg.mxu0
        %v1458 = vadd.f32 %v1381, %v1030
        %v1459 = vadd.f32 %v1384, %v1031
        %v1460 = vadd.f32 %v1389, %v1032
        %v1461 = vadd.f32 %v1392, %v1033
        %v1462 = vadd.f32 %v1397, %v1034
        %v1463 = vadd.f32 %v1400, %v1035
        %v1464 = vadd.f32 %v1405, %v1036
        %v1465 = vadd.f32 %v1408, %v1037
        %v1466 = vadd.f32 %v1413, %v1038
        %v1467 = vadd.f32 %v1416, %v1039
        %v1468 = vadd.f32 %v1421, %v1040
        %v1469 = vadd.f32 %v1424, %v1041
        %v1470 = vadd.f32 %v1429, %v1042
        %v1471 = vadd.f32 %v1432, %v1043
        %v1472 = vadd.f32 %v1437, %v1044
        %v1473 = vadd.f32 %v1440, %v1045
        %v1474 = vadd.f32 %v1445, %v1046
        %v1475 = vadd.f32 %v1448, %v1047
        %v1476 = vadd.f32 %v1453, %v1048
        %v1477 = vmax.f32 %v1458, 0.0
        %v1478 = vmax.f32 %v1459, 0.0
        %v1479 = vmax.f32 %v1460, 0.0
        %v1480 = vmax.f32 %v1461, 0.0
        %v1481 = vmax.f32 %v1462, 0.0
        %v1482 = vmax.f32 %v1463, 0.0
        %v1483 = vmax.f32 %v1464, 0.0
        %v1484 = vmax.f32 %v1465, 0.0
        %v1485 = vmax.f32 %v1466, 0.0
        %v1486 = vmax.f32 %v1467, 0.0
        %v1487 = vmax.f32 %v1468, 0.0
        %v1488 = vmax.f32 %v1469, 0.0
        %v1489 = vmax.f32 %v1470, 0.0
        %v1490 = vmax.f32 %v1471, 0.0
        %v1491 = vmax.f32 %v1472, 0.0
        %v1492 = vmax.f32 %v1473, 0.0
        %v1493 = vmax.f32 %v1474, 0.0
        %v1494 = vmax.f32 %v1475, 0.0
        %v1495 = vmax.f32 %v1476, 0.0
        %v1496 = vpack.c.bf16 %v1478, %v1477
        %v1497 = vpack.c.bf16 %v1480, %v1479
        %v1498 = vpack.c.bf16 %v1482, %v1481
        %v1499 = vpack.c.bf16 %v1484, %v1483
        %v1500 = vpack.c.bf16 %v1486, %v1485
        %v1501 = vpack.c.bf16 %v1488, %v1487
        %v1502 = vpack.c.bf16 %v1490, %v1489
        %v1503 = vpack.c.bf16 %v1492, %v1491
        %v1504 = vpack.c.bf16 %v1494, %v1493
        %v1505 = vpack.c.bf16 %v1495, %v1495
        %s1506 = scalar_lea.vmem %s3, 128
        %v1507 = vld [vmem:[%s1506] sm:$0xf]
        %v1508 = vld [vmem:[%s1506 + $0x4] sm:$0xf]
        %v1509 = vld [vmem:[%s1506 + $0x8] sm:$0xf]
        %v1510 = vld [vmem:[%s1506 + $0xc] sm:$0xf]
        %v1511 = vld [vmem:[%s1506 + $0x10] sm:$0xf]
        %v1512 = vld [vmem:[%s1506 + $0x14] sm:$0xf]
        %v1513 = vld [vmem:[%s1506 + $0x18] sm:$0xf]
        %v1514 = vld [vmem:[%s1506 + $0x1c] sm:$0xf]
        %v1515 = vld [vmem:[%s1506 + $0x20] sm:$0xf]
        %v1516 = vld [vmem:[%s1506 + $0x24] sm:$0xf]
        %v1517 = vld [vmem:[%s1506 + $0x28] sm:$0xf]
        %v1518 = vld [vmem:[%s1506 + $0x2c] sm:$0xf]
        %v1519 = vld [vmem:[%s1506 + $0x30] sm:$0xf]
        %v1520 = vld [vmem:[%s1506 + $0x34] sm:$0xf]
        %v1521 = vld [vmem:[%s1506 + $0x38] sm:$0xf]
        %v1522 = vld [vmem:[%s1506 + $0x3c] sm:$0xf]
        %s1523 = scalar_lea.vmem %s4, 2
        %v1524 = vld [vmem:[%s1523] sm:$0x1]
        %v1526 = vlaneseq
        %v1527 = vshrl.u32 %v1526, 7
        %v1528 = vsub.s32 0, %v1527
        %v1529 = vrot.slane %v1524, %v1528
        %v1547 = vunpack.c.l.b16 %v1507
        %v1548 = vunpack.c.l.b16 %v1508
        %v1549 = vunpack.c.l.b16 %v1509
        %v1550 = vunpack.c.l.b16 %v1510
        %v1551 = vunpack.c.l.b16 %v1511
        %v1552 = vunpack.c.l.b16 %v1512
        %v1553 = vunpack.c.l.b16 %v1513
        %v1554 = vunpack.c.l.b16 %v1514
        %v1555 = vunpack.c.l.b16 %v1515
        %v1556 = vunpack.c.l.b16 %v1516
        %v1557 = vunpack.c.l.b16 %v1517
        %v1558 = vunpack.c.l.b16 %v1518
        %v1559 = vunpack.c.l.b16 %v1519
        %v1560 = vunpack.c.l.b16 %v1520
        %v1561 = vunpack.c.l.b16 %v1521
        %v1562 = vunpack.c.l.b16 %v1522
        %v1563 = vpack.c.b16 %v1548, %v1547
        %v1564 = vpack.c.b16 %v1550, %v1549
        %v1565 = vpack.c.b16 %v1552, %v1551
        %v1566 = vpack.c.b16 %v1554, %v1553
        %v1567 = vpack.c.b16 %v1556, %v1555
        %v1568 = vpack.c.b16 %v1558, %v1557
        %v1569 = vpack.c.b16 %v1560, %v1559
        %v1570 = vpack.c.b16 %v1562, %v1561
        %1579 = vmatprep.subr.bf16.mxu0 0
        %1580 = vmatpush1.bf16.msra.mxu0 %v1563
        %1581 = vmatprep.subr.bf16.mxu0 0
        %1582 = vmatpush1.bf16.msra.mxu0 %v1564
        %1583 = vmatprep.subr.bf16.mxu0 0
        %1584 = vmatpush1.bf16.msra.mxu0 %v1565
        %1585 = vmatprep.subr.bf16.mxu0 0
        %1586 = vmatpush1.bf16.msra.mxu0 %v1566
        %1587 = vmatprep.subr.bf16.mxu0 0
        %1588 = vmatpush1.bf16.msra.mxu0 %v1567
        %1589 = vmatprep.subr.bf16.mxu0 0
        %1590 = vmatpush1.bf16.msra.mxu0 %v1568
        %1591 = vmatprep.subr.bf16.mxu0 0
        %1592 = vmatpush1.bf16.msra.mxu0 %v1569
        %1593 = vmatprep.subr.bf16.mxu0 0
        %1594 = vmatpush1.bf16.msra.mxu0 %v1570
        %1595 = vmatprep.subr.bf16.mxu0 0
        %1596 = vmatpush1.bf16.msra.mxu0 0
        %1597 = vmatprep.subr.bf16.mxu0 0
        %1598 = vmatpush1.bf16.msra.mxu0 0
        %1599 = vmatprep.subr.bf16.mxu0 0
        %1600 = vmatpush1.bf16.msra.mxu0 0
        %1601 = vmatprep.subr.bf16.mxu0 0
        %1602 = vmatpush1.bf16.msra.mxu0 0
        %1603 = vmatprep.subr.bf16.mxu0 0
        %1604 = vmatpush1.bf16.msra.mxu0 0
        %1605 = vmatprep.subr.bf16.mxu0 0
        %1606 = vmatpush1.bf16.msra.mxu0 0
        %1607 = vmatprep.subr.bf16.mxu0 0
        %1608 = vmatpush1.bf16.msra.mxu0 0
        %1609 = vmatprep.subr.bf16.mxu0 0
        %1610 = vmatpush1.bf16.msra.mxu0 0
        %1611 = vmatprep.mubr.bf16.mxu0 0
        %1612 = vmatmul.mubr.bf16.gmra.mrb[0].mxu0 %v1496
        %v1613 = vpop.f32.mrb[0].mxu0
        %v1614 = vadd.f32 %v1529, %v1613
        %v1615 = vpop.f32.mrb[0].mxu0
        %v1616 = vpop.f32.mrb[0].mxu0
        %v1617 = vadd.f32 %v1529, %v1616
        %v1618 = vpop.f32.mrb[0].mxu0
        %1619 = vmatprep.mubr.bf16.mxu0 0
        %1620 = vmatmul.mubr.bf16.gmra.mrb[0].mxu0 %v1497
        %v1621 = vpop.f32.mrb[0].mxu0
        %v1622 = vadd.f32 %v1529, %v1621
        %v1623 = vpop.f32.mrb[0].mxu0
        %v1624 = vpop.f32.mrb[0].mxu0
        %v1625 = vadd.f32 %v1529, %v1624
        %v1626 = vpop.f32.mrb[0].mxu0
        %1627 = vmatprep.mubr.bf16.mxu0 0
        %1628 = vmatmul.mubr.bf16.gmra.mrb[0].mxu0 %v1498
        %v1629 = vpop.f32.mrb[0].mxu0
        %v1630 = vadd.f32 %v1529, %v1629
        %v1631 = vpop.f32.mrb[0].mxu0
        %v1632 = vpop.f32.mrb[0].mxu0
        %v1633 = vadd.f32 %v1529, %v1632
        %v1634 = vpop.f32.mrb[0].mxu0
        %1635 = vmatprep.mubr.bf16.mxu0 0
        %1636 = vmatmul.mubr.bf16.gmra.mrb[0].mxu0 %v1499
        %v1637 = vpop.f32.mrb[0].mxu0
        %v1638 = vadd.f32 %v1529, %v1637
        %v1639 = vpop.f32.mrb[0].mxu0
        %v1640 = vpop.f32.mrb[0].mxu0
        %v1641 = vadd.f32 %v1529, %v1640
        %v1642 = vpop.f32.mrb[0].mxu0
        %1643 = vmatprep.mubr.bf16.mxu0 0
        %1644 = vmatmul.mubr.bf16.gmra.mrb[0].mxu0 %v1500
        %v1645 = vpop.f32.mrb[0].mxu0
        %v1646 = vadd.f32 %v1529, %v1645
        %v1647 = vpop.f32.mrb[0].mxu0
        %v1648 = vpop.f32.mrb[0].mxu0
        %v1649 = vadd.f32 %v1529, %v1648
        %v1650 = vpop.f32.mrb[0].mxu0
        %1651 = vmatprep.mubr.bf16.mxu0 0
        %1652 = vmatmul.mubr.bf16.gmra.mrb[0].mxu0 %v1501
        %v1653 = vpop.f32.mrb[0].mxu0
        %v1654 = vadd.f32 %v1529, %v1653
        %v1655 = vpop.f32.mrb[0].mxu0
        %v1656 = vpop.f32.mrb[0].mxu0
        %v1657 = vadd.f32 %v1529, %v1656
        %v1658 = vpop.f32.mrb[0].mxu0
        %1659 = vmatprep.mubr.bf16.mxu0 0
        %1660 = vmatmul.mubr.bf16.gmra.mrb[0].mxu0 %v1502
        %v1661 = vpop.f32.mrb[0].mxu0
        %v1662 = vadd.f32 %v1529, %v1661
        %v1663 = vpop.f32.mrb[0].mxu0
        %v1664 = vpop.f32.mrb[0].mxu0
        %v1665 = vadd.f32 %v1529, %v1664
        %v1666 = vpop.f32.mrb[0].mxu0
        %1667 = vmatprep.mubr.bf16.mxu0 0
        %1668 = vmatmul.mubr.bf16.gmra.mrb[0].mxu0 %v1503
        %v1669 = vpop.f32.mrb[0].mxu0
        %v1670 = vadd.f32 %v1529, %v1669
        %v1671 = vpop.f32.mrb[0].mxu0
        %v1672 = vpop.f32.mrb[0].mxu0
        %v1673 = vadd.f32 %v1529, %v1672
        %v1674 = vpop.f32.mrb[0].mxu0
        %1675 = vmatprep.mubr.bf16.mxu0 0
        %1676 = vmatmul.mubr.bf16.gmra.mrb[0].mxu0 %v1504
        %v1677 = vpop.f32.mrb[0].mxu0
        %v1678 = vadd.f32 %v1529, %v1677
        %v1679 = vpop.f32.mrb[0].mxu0
        %v1680 = vpop.f32.mrb[0].mxu0
        %v1681 = vadd.f32 %v1529, %v1680
        %v1682 = vpop.f32.mrb[0].mxu0
        %1683 = vmatprep.mubr.bf16.mxu0 0
        %1684 = vmatmul.mubr.bf16.gmra.mrb[0].mxu0 %v1505
        %v1685 = vpop.f32.mrb[0].mxu0
        %v1686 = vadd.f32 %v1529, %v1685
        %v1687 = vpop.f32.mrb[0].mxu0
        %v1688 = vpop.f32.mrb[0].mxu0
        %v1689 = vpop.f32.mrb[0].mxu0
        %1690 = vdwg.mxu0
        %v1691 = vmax.f32 %v1614, 0.0
        %v1692 = vmax.f32 %v1617, 0.0
        %v1693 = vmax.f32 %v1622, 0.0
        %v1694 = vmax.f32 %v1625, 0.0
        %v1695 = vmax.f32 %v1630, 0.0
        %v1696 = vmax.f32 %v1633, 0.0
        %v1697 = vmax.f32 %v1638, 0.0
        %v1698 = vmax.f32 %v1641, 0.0
        %v1699 = vmax.f32 %v1646, 0.0
        %v1700 = vmax.f32 %v1649, 0.0
        %v1701 = vmax.f32 %v1654, 0.0
        %v1702 = vmax.f32 %v1657, 0.0
        %v1703 = vmax.f32 %v1662, 0.0
        %v1704 = vmax.f32 %v1665, 0.0
        %v1705 = vmax.f32 %v1670, 0.0
        %v1706 = vmax.f32 %v1673, 0.0
        %v1707 = vmax.f32 %v1678, 0.0
        %v1708 = vmax.f32 %v1681, 0.0
        %v1709 = vmax.f32 %v1686, 0.0
        %v1710 = vpack.c.bf16 %v1692, %v1691
        %v1711 = vpack.c.bf16 %v1694, %v1693
        %v1712 = vpack.c.bf16 %v1696, %v1695
        %v1713 = vpack.c.bf16 %v1698, %v1697
        %v1714 = vpack.c.bf16 %v1700, %v1699
        %v1715 = vpack.c.bf16 %v1702, %v1701
        %v1716 = vpack.c.bf16 %v1704, %v1703
        %v1717 = vpack.c.bf16 %v1706, %v1705
        %v1718 = vpack.c.bf16 %v1708, %v1707
        %v1719 = vpack.c.bf16 %v1709, %v1709
        %s1720 = scalar_lea.vmem %s5, 128
        %v1721 = vld [vmem:[%s1720] sm:$0xf]
        %v1722 = vld [vmem:[%s1720 + $0x4] sm:$0xf]
        %v1723 = vld [vmem:[%s1720 + $0x8] sm:$0xf]
        %v1724 = vld [vmem:[%s1720 + $0xc] sm:$0xf]
        %v1725 = vld [vmem:[%s1720 + $0x10] sm:$0xf]
        %v1726 = vld [vmem:[%s1720 + $0x14] sm:$0xf]
        %v1727 = vld [vmem:[%s1720 + $0x18] sm:$0xf]
        %v1728 = vld [vmem:[%s1720 + $0x1c] sm:$0xf]
        %v1729 = vld [vmem:[%s1720 + $0x20] sm:$0xf]
        %v1730 = vld [vmem:[%s1720 + $0x24] sm:$0xf]
        %v1731 = vld [vmem:[%s1720 + $0x28] sm:$0xf]
        %v1732 = vld [vmem:[%s1720 + $0x2c] sm:$0xf]
        %v1733 = vld [vmem:[%s1720 + $0x30] sm:$0xf]
        %v1734 = vld [vmem:[%s1720 + $0x34] sm:$0xf]
        %v1735 = vld [vmem:[%s1720 + $0x38] sm:$0xf]
        %v1736 = vld [vmem:[%s1720 + $0x3c] sm:$0xf]
        %s1737 = scalar_lea.vmem %s6, 2
        %v1738 = vld [vmem:[%s1737] sm:$0x1]
        %v1740 = vlaneseq
        %v1741 = vshrl.u32 %v1740, 7
        %v1742 = vsub.s32 0, %v1741
        %v1743 = vrot.slane %v1738, %v1742
        %v1761 = vunpack.c.l.b16 %v1721
        %v1762 = vunpack.c.l.b16 %v1722
        %v1763 = vunpack.c.l.b16 %v1723
        %v1764 = vunpack.c.l.b16 %v1724
        %v1765 = vunpack.c.l.b16 %v1725
        %v1766 = vunpack.c.l.b16 %v1726
        %v1767 = vunpack.c.l.b16 %v1727
        %v1768 = vunpack.c.l.b16 %v1728
        %v1769 = vunpack.c.l.b16 %v1729
        %v1770 = vunpack.c.l.b16 %v1730
        %v1771 = vunpack.c.l.b16 %v1731
        %v1772 = vunpack.c.l.b16 %v1732
        %v1773 = vunpack.c.l.b16 %v1733
        %v1774 = vunpack.c.l.b16 %v1734
        %v1775 = vunpack.c.l.b16 %v1735
        %v1776 = vunpack.c.l.b16 %v1736
        %v1777 = vpack.c.b16 %v1762, %v1761
        %v1778 = vpack.c.b16 %v1764, %v1763
        %v1779 = vpack.c.b16 %v1766, %v1765
        %v1780 = vpack.c.b16 %v1768, %v1767
        %v1781 = vpack.c.b16 %v1770, %v1769
        %v1782 = vpack.c.b16 %v1772, %v1771
        %v1783 = vpack.c.b16 %v1774, %v1773
        %v1784 = vpack.c.b16 %v1776, %v1775
        %1793 = vmatprep.subr.bf16.mxu0 0
        %1794 = vmatpush1.bf16.msra.mxu0 %v1777
        %1795 = vmatprep.subr.bf16.mxu0 0
        %1796 = vmatpush1.bf16.msra.mxu0 %v1778
        %1797 = vmatprep.subr.bf16.mxu0 0
        %1798 = vmatpush1.bf16.msra.mxu0 %v1779
        %1799 = vmatprep.subr.bf16.mxu0 0
        %1800 = vmatpush1.bf16.msra.mxu0 %v1780
        %1801 = vmatprep.subr.bf16.mxu0 0
        %1802 = vmatpush1.bf16.msra.mxu0 %v1781
        %1803 = vmatprep.subr.bf16.mxu0 0
        %1804 = vmatpush1.bf16.msra.mxu0 %v1782
        %1805 = vmatprep.subr.bf16.mxu0 0
        %1806 = vmatpush1.bf16.msra.mxu0 %v1783
        %1807 = vmatprep.subr.bf16.mxu0 0
        %1808 = vmatpush1.bf16.msra.mxu0 %v1784
        %1809 = vmatprep.subr.bf16.mxu0 0
        %1810 = vmatpush1.bf16.msra.mxu0 0
        %1811 = vmatprep.subr.bf16.mxu0 0
        %1812 = vmatpush1.bf16.msra.mxu0 0
        %1813 = vmatprep.subr.bf16.mxu0 0
        %1814 = vmatpush1.bf16.msra.mxu0 0
        %1815 = vmatprep.subr.bf16.mxu0 0
        %1816 = vmatpush1.bf16.msra.mxu0 0
        %1817 = vmatprep.subr.bf16.mxu0 0
        %1818 = vmatpush1.bf16.msra.mxu0 0
        %1819 = vmatprep.subr.bf16.mxu0 0
        %1820 = vmatpush1.bf16.msra.mxu0 0
        %1821 = vmatprep.subr.bf16.mxu0 0
        %1822 = vmatpush1.bf16.msra.mxu0 0
        %1823 = vmatprep.subr.bf16.mxu0 0
        %1824 = vmatpush1.bf16.msra.mxu0 0
        %1825 = vmatprep.mubr.bf16.mxu0 0
        %1826 = vmatmul.mubr.bf16.gmra.mrb[0].mxu0 %v1710
        %v1827 = vpop.f32.mrb[0].mxu0
        %v1828 = vadd.f32 %v1743, %v1827
        %v1829 = vpop.f32.mrb[0].mxu0
        %v1830 = vpop.f32.mrb[0].mxu0
        %v1831 = vadd.f32 %v1743, %v1830
        %v1832 = vpop.f32.mrb[0].mxu0
        %1833 = vmatprep.mubr.bf16.mxu0 0
        %1834 = vmatmul.mubr.bf16.gmra.mrb[0].mxu0 %v1711
        %v1835 = vpop.f32.mrb[0].mxu0
        %v1836 = vadd.f32 %v1743, %v1835
        %v1837 = vpop.f32.mrb[0].mxu0
        %v1838 = vpop.f32.mrb[0].mxu0
        %v1839 = vadd.f32 %v1743, %v1838
        %v1840 = vpop.f32.mrb[0].mxu0
        %1841 = vmatprep.mubr.bf16.mxu0 0
        %1842 = vmatmul.mubr.bf16.gmra.mrb[0].mxu0 %v1712
        %v1843 = vpop.f32.mrb[0].mxu0
        %v1844 = vadd.f32 %v1743, %v1843
        %v1845 = vpop.f32.mrb[0].mxu0
        %v1846 = vpop.f32.mrb[0].mxu0
        %v1847 = vadd.f32 %v1743, %v1846
        %v1848 = vpop.f32.mrb[0].mxu0
        %1849 = vmatprep.mubr.bf16.mxu0 0
        %1850 = vmatmul.mubr.bf16.gmra.mrb[0].mxu0 %v1713
        %v1851 = vpop.f32.mrb[0].mxu0
        %v1852 = vadd.f32 %v1743, %v1851
        %v1853 = vpop.f32.mrb[0].mxu0
        %v1854 = vpop.f32.mrb[0].mxu0
        %v1855 = vadd.f32 %v1743, %v1854
        %v1856 = vpop.f32.mrb[0].mxu0
        %1857 = vmatprep.mubr.bf16.mxu0 0
        %1858 = vmatmul.mubr.bf16.gmra.mrb[0].mxu0 %v1714
        %v1859 = vpop.f32.mrb[0].mxu0
        %v1860 = vadd.f32 %v1743, %v1859
        %v1861 = vpop.f32.mrb[0].mxu0
        %v1862 = vpop.f32.mrb[0].mxu0
        %v1863 = vadd.f32 %v1743, %v1862
        %v1864 = vpop.f32.mrb[0].mxu0
        %1865 = vmatprep.mubr.bf16.mxu0 0
        %1866 = vmatmul.mubr.bf16.gmra.mrb[0].mxu0 %v1715
        %v1867 = vpop.f32.mrb[0].mxu0
        %v1868 = vadd.f32 %v1743, %v1867
        %v1869 = vpop.f32.mrb[0].mxu0
        %v1870 = vpop.f32.mrb[0].mxu0
        %v1871 = vadd.f32 %v1743, %v1870
        %v1872 = vpop.f32.mrb[0].mxu0
        %1873 = vmatprep.mubr.bf16.mxu0 0
        %1874 = vmatmul.mubr.bf16.gmra.mrb[0].mxu0 %v1716
        %v1875 = vpop.f32.mrb[0].mxu0
        %v1876 = vadd.f32 %v1743, %v1875
        %v1877 = vpop.f32.mrb[0].mxu0
        %v1878 = vpop.f32.mrb[0].mxu0
        %v1879 = vadd.f32 %v1743, %v1878
        %v1880 = vpop.f32.mrb[0].mxu0
        %1881 = vmatprep.mubr.bf16.mxu0 0
        %1882 = vmatmul.mubr.bf16.gmra.mrb[0].mxu0 %v1717
        %v1883 = vpop.f32.mrb[0].mxu0
        %v1884 = vadd.f32 %v1743, %v1883
        %v1885 = vpop.f32.mrb[0].mxu0
        %v1886 = vpop.f32.mrb[0].mxu0
        %v1887 = vadd.f32 %v1743, %v1886
        %v1888 = vpop.f32.mrb[0].mxu0
        %1889 = vmatprep.mubr.bf16.mxu0 0
        %1890 = vmatmul.mubr.bf16.gmra.mrb[0].mxu0 %v1718
        %v1891 = vpop.f32.mrb[0].mxu0
        %v1892 = vadd.f32 %v1743, %v1891
        %v1893 = vpop.f32.mrb[0].mxu0
        %v1894 = vpop.f32.mrb[0].mxu0
        %v1895 = vadd.f32 %v1743, %v1894
        %v1896 = vpop.f32.mrb[0].mxu0
        %1897 = vmatprep.mubr.bf16.mxu0 0
        %1898 = vmatmul.mubr.bf16.gmra.mrb[0].mxu0 %v1719
        %v1899 = vpop.f32.mrb[0].mxu0
        %v1900 = vadd.f32 %v1743, %v1899
        %v1901 = vpop.f32.mrb[0].mxu0
        %v1902 = vpop.f32.mrb[0].mxu0
        %v1903 = vpop.f32.mrb[0].mxu0
        %1904 = vdwg.mxu0
        %v1905 = vadd.f32 %v1828, %v1477
        %v1906 = vadd.f32 %v1831, %v1478
        %v1907 = vadd.f32 %v1836, %v1479
        %v1908 = vadd.f32 %v1839, %v1480
        %v1909 = vadd.f32 %v1844, %v1481
        %v1910 = vadd.f32 %v1847, %v1482
        %v1911 = vadd.f32 %v1852, %v1483
        %v1912 = vadd.f32 %v1855, %v1484
        %v1913 = vadd.f32 %v1860, %v1485
        %v1914 = vadd.f32 %v1863, %v1486
        %v1915 = vadd.f32 %v1868, %v1487
        %v1916 = vadd.f32 %v1871, %v1488
        %v1917 = vadd.f32 %v1876, %v1489
        %v1918 = vadd.f32 %v1879, %v1490
        %v1919 = vadd.f32 %v1884, %v1491
        %v1920 = vadd.f32 %v1887, %v1492
        %v1921 = vadd.f32 %v1892, %v1493
        %v1922 = vadd.f32 %v1895, %v1494
        %v1923 = vadd.f32 %v1900, %v1495
        %v1924 = vmax.f32 %v1905, 0.0
        %v1925 = vmax.f32 %v1906, 0.0
        %v1926 = vmax.f32 %v1907, 0.0
        %v1927 = vmax.f32 %v1908, 0.0
        %v1928 = vmax.f32 %v1909, 0.0
        %v1929 = vmax.f32 %v1910, 0.0
        %v1930 = vmax.f32 %v1911, 0.0
        %v1931 = vmax.f32 %v1912, 0.0
        %v1932 = vmax.f32 %v1913, 0.0
        %v1933 = vmax.f32 %v1914, 0.0
        %v1934 = vmax.f32 %v1915, 0.0
        %v1935 = vmax.f32 %v1916, 0.0
        %v1936 = vmax.f32 %v1917, 0.0
        %v1937 = vmax.f32 %v1918, 0.0
        %v1938 = vmax.f32 %v1919, 0.0
        %v1939 = vmax.f32 %v1920, 0.0
        %v1940 = vmax.f32 %v1921, 0.0
        %v1941 = vmax.f32 %v1922, 0.0
        %v1942 = vmax.f32 %v1923, 0.0
        %v1943 = vpack.c.bf16 %v1925, %v1924
        %v1944 = vpack.c.bf16 %v1927, %v1926
        %v1945 = vpack.c.bf16 %v1929, %v1928
        %v1946 = vpack.c.bf16 %v1931, %v1930
        %v1947 = vpack.c.bf16 %v1933, %v1932
        %v1948 = vpack.c.bf16 %v1935, %v1934
        %v1949 = vpack.c.bf16 %v1937, %v1936
        %v1950 = vpack.c.bf16 %v1939, %v1938
        %v1951 = vpack.c.bf16 %v1941, %v1940
        %v1952 = vpack.c.bf16 %v1942, %v1942
        %s1953 = scalar_lea.vmem %s3, 192
        %v1954 = vld [vmem:[%s1953] sm:$0xf]
        %v1955 = vld [vmem:[%s1953 + $0x4] sm:$0xf]
        %v1956 = vld [vmem:[%s1953 + $0x8] sm:$0xf]
        %v1957 = vld [vmem:[%s1953 + $0xc] sm:$0xf]
        %v1958 = vld [vmem:[%s1953 + $0x10] sm:$0xf]
        %v1959 = vld [vmem:[%s1953 + $0x14] sm:$0xf]
        %v1960 = vld [vmem:[%s1953 + $0x18] sm:$0xf]
        %v1961 = vld [vmem:[%s1953 + $0x1c] sm:$0xf]
        %v1962 = vld [vmem:[%s1953 + $0x20] sm:$0xf]
        %v1963 = vld [vmem:[%s1953 + $0x24] sm:$0xf]
        %v1964 = vld [vmem:[%s1953 + $0x28] sm:$0xf]
        %v1965 = vld [vmem:[%s1953 + $0x2c] sm:$0xf]
        %v1966 = vld [vmem:[%s1953 + $0x30] sm:$0xf]
        %v1967 = vld [vmem:[%s1953 + $0x34] sm:$0xf]
        %v1968 = vld [vmem:[%s1953 + $0x38] sm:$0xf]
        %v1969 = vld [vmem:[%s1953 + $0x3c] sm:$0xf]
        %s1970 = scalar_lea.vmem %s4, 3
        %v1971 = vld [vmem:[%s1970] sm:$0x1]
        %v1973 = vlaneseq
        %v1974 = vshrl.u32 %v1973, 7
        %v1975 = vsub.s32 0, %v1974
        %v1976 = vrot.slane %v1971, %v1975
        %v1994 = vunpack.c.l.b16 %v1954
        %v1995 = vunpack.c.l.b16 %v1955
        %v1996 = vunpack.c.l.b16 %v1956
        %v1997 = vunpack.c.l.b16 %v1957
        %v1998 = vunpack.c.l.b16 %v1958
        %v1999 = vunpack.c.l.b16 %v1959
        %v2000 = vunpack.c.l.b16 %v1960
        %v2001 = vunpack.c.l.b16 %v1961
        %v2002 = vunpack.c.l.b16 %v1962
        %v2003 = vunpack.c.l.b16 %v1963
        %v2004 = vunpack.c.l.b16 %v1964
        %v2005 = vunpack.c.l.b16 %v1965
        %v2006 = vunpack.c.l.b16 %v1966
        %v2007 = vunpack.c.l.b16 %v1967
        %v2008 = vunpack.c.l.b16 %v1968
        %v2009 = vunpack.c.l.b16 %v1969
        %v2010 = vpack.c.b16 %v1995, %v1994
        %v2011 = vpack.c.b16 %v1997, %v1996
        %v2012 = vpack.c.b16 %v1999, %v1998
        %v2013 = vpack.c.b16 %v2001, %v2000
        %v2014 = vpack.c.b16 %v2003, %v2002
        %v2015 = vpack.c.b16 %v2005, %v2004
        %v2016 = vpack.c.b16 %v2007, %v2006
        %v2017 = vpack.c.b16 %v2009, %v2008
        %2026 = vmatprep.subr.bf16.mxu0 0
        %2027 = vmatpush1.bf16.msra.mxu0 %v2010
        %2028 = vmatprep.subr.bf16.mxu0 0
        %2029 = vmatpush1.bf16.msra.mxu0 %v2011
        %2030 = vmatprep.subr.bf16.mxu0 0
        %2031 = vmatpush1.bf16.msra.mxu0 %v2012
        %2032 = vmatprep.subr.bf16.mxu0 0
        %2033 = vmatpush1.bf16.msra.mxu0 %v2013
        %2034 = vmatprep.subr.bf16.mxu0 0
        %2035 = vmatpush1.bf16.msra.mxu0 %v2014
        %2036 = vmatprep.subr.bf16.mxu0 0
        %2037 = vmatpush1.bf16.msra.mxu0 %v2015
        %2038 = vmatprep.subr.bf16.mxu0 0
        %2039 = vmatpush1.bf16.msra.mxu0 %v2016
        %2040 = vmatprep.subr.bf16.mxu0 0
        %2041 = vmatpush1.bf16.msra.mxu0 %v2017
        %2042 = vmatprep.subr.bf16.mxu0 0
        %2043 = vmatpush1.bf16.msra.mxu0 0
        %2044 = vmatprep.subr.bf16.mxu0 0
        %2045 = vmatpush1.bf16.msra.mxu0 0
        %2046 = vmatprep.subr.bf16.mxu0 0
        %2047 = vmatpush1.bf16.msra.mxu0 0
        %2048 = vmatprep.subr.bf16.mxu0 0
        %2049 = vmatpush1.bf16.msra.mxu0 0
        %2050 = vmatprep.subr.bf16.mxu0 0
        %2051 = vmatpush1.bf16.msra.mxu0 0
        %2052 = vmatprep.subr.bf16.mxu0 0
        %2053 = vmatpush1.bf16.msra.mxu0 0
        %2054 = vmatprep.subr.bf16.mxu0 0
        %2055 = vmatpush1.bf16.msra.mxu0 0
        %2056 = vmatprep.subr.bf16.mxu0 0
        %2057 = vmatpush1.bf16.msra.mxu0 0
        %2058 = vmatprep.mubr.bf16.mxu0 0
        %2059 = vmatmul.mubr.bf16.gmra.mrb[0].mxu0 %v1943
        %v2060 = vpop.f32.mrb[0].mxu0
        %v2061 = vadd.f32 %v1976, %v2060
        %v2062 = vpop.f32.mrb[0].mxu0
        %v2063 = vpop.f32.mrb[0].mxu0
        %v2064 = vadd.f32 %v1976, %v2063
        %v2065 = vpop.f32.mrb[0].mxu0
        %2066 = vmatprep.mubr.bf16.mxu0 0
        %2067 = vmatmul.mubr.bf16.gmra.mrb[0].mxu0 %v1944
        %v2068 = vpop.f32.mrb[0].mxu0
        %v2069 = vadd.f32 %v1976, %v2068
        %v2070 = vpop.f32.mrb[0].mxu0
        %v2071 = vpop.f32.mrb[0].mxu0
        %v2072 = vadd.f32 %v1976, %v2071
        %v2073 = vpop.f32.mrb[0].mxu0
        %2074 = vmatprep.mubr.bf16.mxu0 0
        %2075 = vmatmul.mubr.bf16.gmra.mrb[0].mxu0 %v1945
        %v2076 = vpop.f32.mrb[0].mxu0
        %v2077 = vadd.f32 %v1976, %v2076
        %v2078 = vpop.f32.mrb[0].mxu0
        %v2079 = vpop.f32.mrb[0].mxu0
        %v2080 = vadd.f32 %v1976, %v2079
        %v2081 = vpop.f32.mrb[0].mxu0
        %2082 = vmatprep.mubr.bf16.mxu0 0
        %2083 = vmatmul.mubr.bf16.gmra.mrb[0].mxu0 %v1946
        %v2084 = vpop.f32.mrb[0].mxu0
        %v2085 = vadd.f32 %v1976, %v2084
        %v2086 = vpop.f32.mrb[0].mxu0
        %v2087 = vpop.f32.mrb[0].mxu0
        %v2088 = vadd.f32 %v1976, %v2087
        %v2089 = vpop.f32.mrb[0].mxu0
        %2090 = vmatprep.mubr.bf16.mxu0 0
        %2091 = vmatmul.mubr.bf16.gmra.mrb[0].mxu0 %v1947
        %v2092 = vpop.f32.mrb[0].mxu0
        %v2093 = vadd.f32 %v1976, %v2092
        %v2094 = vpop.f32.mrb[0].mxu0
        %v2095 = vpop.f32.mrb[0].mxu0
        %v2096 = vadd.f32 %v1976, %v2095
        %v2097 = vpop.f32.mrb[0].mxu0
        %2098 = vmatprep.mubr.bf16.mxu0 0
        %2099 = vmatmul.mubr.bf16.gmra.mrb[0].mxu0 %v1948
        %v2100 = vpop.f32.mrb[0].mxu0
        %v2101 = vadd.f32 %v1976, %v2100
        %v2102 = vpop.f32.mrb[0].mxu0
        %v2103 = vpop.f32.mrb[0].mxu0
        %v2104 = vadd.f32 %v1976, %v2103
        %v2105 = vpop.f32.mrb[0].mxu0
        %2106 = vmatprep.mubr.bf16.mxu0 0
        %2107 = vmatmul.mubr.bf16.gmra.mrb[0].mxu0 %v1949
        %v2108 = vpop.f32.mrb[0].mxu0
        %v2109 = vadd.f32 %v1976, %v2108
        %v2110 = vpop.f32.mrb[0].mxu0
        %v2111 = vpop.f32.mrb[0].mxu0
        %v2112 = vadd.f32 %v1976, %v2111
        %v2113 = vpop.f32.mrb[0].mxu0
        %2114 = vmatprep.mubr.bf16.mxu0 0
        %2115 = vmatmul.mubr.bf16.gmra.mrb[0].mxu0 %v1950
        %v2116 = vpop.f32.mrb[0].mxu0
        %v2117 = vadd.f32 %v1976, %v2116
        %v2118 = vpop.f32.mrb[0].mxu0
        %v2119 = vpop.f32.mrb[0].mxu0
        %v2120 = vadd.f32 %v1976, %v2119
        %v2121 = vpop.f32.mrb[0].mxu0
        %2122 = vmatprep.mubr.bf16.mxu0 0
        %2123 = vmatmul.mubr.bf16.gmra.mrb[0].mxu0 %v1951
        %v2124 = vpop.f32.mrb[0].mxu0
        %v2125 = vadd.f32 %v1976, %v2124
        %v2126 = vpop.f32.mrb[0].mxu0
        %v2127 = vpop.f32.mrb[0].mxu0
        %v2128 = vadd.f32 %v1976, %v2127
        %v2129 = vpop.f32.mrb[0].mxu0
        %2130 = vmatprep.mubr.bf16.mxu0 0
        %2131 = vmatmul.mubr.bf16.gmra.mrb[0].mxu0 %v1952
        %v2132 = vpop.f32.mrb[0].mxu0
        %v2133 = vadd.f32 %v1976, %v2132
        %v2134 = vpop.f32.mrb[0].mxu0
        %v2135 = vpop.f32.mrb[0].mxu0
        %v2136 = vpop.f32.mrb[0].mxu0
        %2137 = vdwg.mxu0
        %v2138 = vmax.f32 %v2061, 0.0
        %v2139 = vmax.f32 %v2064, 0.0
        %v2140 = vmax.f32 %v2069, 0.0
        %v2141 = vmax.f32 %v2072, 0.0
        %v2142 = vmax.f32 %v2077, 0.0
        %v2143 = vmax.f32 %v2080, 0.0
        %v2144 = vmax.f32 %v2085, 0.0
        %v2145 = vmax.f32 %v2088, 0.0
        %v2146 = vmax.f32 %v2093, 0.0
        %v2147 = vmax.f32 %v2096, 0.0
        %v2148 = vmax.f32 %v2101, 0.0
        %v2149 = vmax.f32 %v2104, 0.0
        %v2150 = vmax.f32 %v2109, 0.0
        %v2151 = vmax.f32 %v2112, 0.0
        %v2152 = vmax.f32 %v2117, 0.0
        %v2153 = vmax.f32 %v2120, 0.0
        %v2154 = vmax.f32 %v2125, 0.0
        %v2155 = vmax.f32 %v2128, 0.0
        %v2156 = vmax.f32 %v2133, 0.0
        %v2157 = vpack.c.bf16 %v2139, %v2138
        %v2158 = vpack.c.bf16 %v2141, %v2140
        %v2159 = vpack.c.bf16 %v2143, %v2142
        %v2160 = vpack.c.bf16 %v2145, %v2144
        %v2161 = vpack.c.bf16 %v2147, %v2146
        %v2162 = vpack.c.bf16 %v2149, %v2148
        %v2163 = vpack.c.bf16 %v2151, %v2150
        %v2164 = vpack.c.bf16 %v2153, %v2152
        %v2165 = vpack.c.bf16 %v2155, %v2154
        %v2166 = vpack.c.bf16 %v2156, %v2156
        %s2167 = scalar_lea.vmem %s5, 192
        %v2168 = vld [vmem:[%s2167] sm:$0xf]
        %v2169 = vld [vmem:[%s2167 + $0x4] sm:$0xf]
        %v2170 = vld [vmem:[%s2167 + $0x8] sm:$0xf]
        %v2171 = vld [vmem:[%s2167 + $0xc] sm:$0xf]
        %v2172 = vld [vmem:[%s2167 + $0x10] sm:$0xf]
        %v2173 = vld [vmem:[%s2167 + $0x14] sm:$0xf]
        %v2174 = vld [vmem:[%s2167 + $0x18] sm:$0xf]
        %v2175 = vld [vmem:[%s2167 + $0x1c] sm:$0xf]
        %v2176 = vld [vmem:[%s2167 + $0x20] sm:$0xf]
        %v2177 = vld [vmem:[%s2167 + $0x24] sm:$0xf]
        %v2178 = vld [vmem:[%s2167 + $0x28] sm:$0xf]
        %v2179 = vld [vmem:[%s2167 + $0x2c] sm:$0xf]
        %v2180 = vld [vmem:[%s2167 + $0x30] sm:$0xf]
        %v2181 = vld [vmem:[%s2167 + $0x34] sm:$0xf]
        %v2182 = vld [vmem:[%s2167 + $0x38] sm:$0xf]
        %v2183 = vld [vmem:[%s2167 + $0x3c] sm:$0xf]
        %s2184 = scalar_lea.vmem %s6, 3
        %v2185 = vld [vmem:[%s2184] sm:$0x1]
        %v2187 = vlaneseq
        %v2188 = vshrl.u32 %v2187, 7
        %v2189 = vsub.s32 0, %v2188
        %v2190 = vrot.slane %v2185, %v2189
        %v2208 = vunpack.c.l.b16 %v2168
        %v2209 = vunpack.c.l.b16 %v2169
        %v2210 = vunpack.c.l.b16 %v2170
        %v2211 = vunpack.c.l.b16 %v2171
        %v2212 = vunpack.c.l.b16 %v2172
        %v2213 = vunpack.c.l.b16 %v2173
        %v2214 = vunpack.c.l.b16 %v2174
        %v2215 = vunpack.c.l.b16 %v2175
        %v2216 = vunpack.c.l.b16 %v2176
        %v2217 = vunpack.c.l.b16 %v2177
        %v2218 = vunpack.c.l.b16 %v2178
        %v2219 = vunpack.c.l.b16 %v2179
        %v2220 = vunpack.c.l.b16 %v2180
        %v2221 = vunpack.c.l.b16 %v2181
        %v2222 = vunpack.c.l.b16 %v2182
        %v2223 = vunpack.c.l.b16 %v2183
        %v2224 = vpack.c.b16 %v2209, %v2208
        %v2225 = vpack.c.b16 %v2211, %v2210
        %v2226 = vpack.c.b16 %v2213, %v2212
        %v2227 = vpack.c.b16 %v2215, %v2214
        %v2228 = vpack.c.b16 %v2217, %v2216
        %v2229 = vpack.c.b16 %v2219, %v2218
        %v2230 = vpack.c.b16 %v2221, %v2220
        %v2231 = vpack.c.b16 %v2223, %v2222
        %2240 = vmatprep.subr.bf16.mxu0 0
        %2241 = vmatpush1.bf16.msra.mxu0 %v2224
        %2242 = vmatprep.subr.bf16.mxu0 0
        %2243 = vmatpush1.bf16.msra.mxu0 %v2225
        %2244 = vmatprep.subr.bf16.mxu0 0
        %2245 = vmatpush1.bf16.msra.mxu0 %v2226
        %2246 = vmatprep.subr.bf16.mxu0 0
        %2247 = vmatpush1.bf16.msra.mxu0 %v2227
        %2248 = vmatprep.subr.bf16.mxu0 0
        %2249 = vmatpush1.bf16.msra.mxu0 %v2228
        %2250 = vmatprep.subr.bf16.mxu0 0
        %2251 = vmatpush1.bf16.msra.mxu0 %v2229
        %2252 = vmatprep.subr.bf16.mxu0 0
        %2253 = vmatpush1.bf16.msra.mxu0 %v2230
        %2254 = vmatprep.subr.bf16.mxu0 0
        %2255 = vmatpush1.bf16.msra.mxu0 %v2231
        %2256 = vmatprep.subr.bf16.mxu0 0
        %2257 = vmatpush1.bf16.msra.mxu0 0
        %2258 = vmatprep.subr.bf16.mxu0 0
        %2259 = vmatpush1.bf16.msra.mxu0 0
        %2260 = vmatprep.subr.bf16.mxu0 0
        %2261 = vmatpush1.bf16.msra.mxu0 0
        %2262 = vmatprep.subr.bf16.mxu0 0
        %2263 = vmatpush1.bf16.msra.mxu0 0
        %2264 = vmatprep.subr.bf16.mxu0 0
        %2265 = vmatpush1.bf16.msra.mxu0 0
        %2266 = vmatprep.subr.bf16.mxu0 0
        %2267 = vmatpush1.bf16.msra.mxu0 0
        %2268 = vmatprep.subr.bf16.mxu0 0
        %2269 = vmatpush1.bf16.msra.mxu0 0
        %2270 = vmatprep.subr.bf16.mxu0 0
        %2271 = vmatpush1.bf16.msra.mxu0 0
        %2272 = vmatprep.mubr.bf16.mxu0 0
        %2273 = vmatmul.mubr.bf16.gmra.mrb[0].mxu0 %v2157
        %v2274 = vpop.f32.mrb[0].mxu0
        %v2275 = vadd.f32 %v2190, %v2274
        %v2276 = vpop.f32.mrb[0].mxu0
        %v2277 = vpop.f32.mrb[0].mxu0
        %v2278 = vadd.f32 %v2190, %v2277
        %v2279 = vpop.f32.mrb[0].mxu0
        %2280 = vmatprep.mubr.bf16.mxu0 0
        %2281 = vmatmul.mubr.bf16.gmra.mrb[0].mxu0 %v2158
        %v2282 = vpop.f32.mrb[0].mxu0
        %v2283 = vadd.f32 %v2190, %v2282
        %v2284 = vpop.f32.mrb[0].mxu0
        %v2285 = vpop.f32.mrb[0].mxu0
        %v2286 = vadd.f32 %v2190, %v2285
        %v2287 = vpop.f32.mrb[0].mxu0
        %2288 = vmatprep.mubr.bf16.mxu0 0
        %2289 = vmatmul.mubr.bf16.gmra.mrb[0].mxu0 %v2159
        %v2290 = vpop.f32.mrb[0].mxu0
        %v2291 = vadd.f32 %v2190, %v2290
        %v2292 = vpop.f32.mrb[0].mxu0
        %v2293 = vpop.f32.mrb[0].mxu0
        %v2294 = vadd.f32 %v2190, %v2293
        %v2295 = vpop.f32.mrb[0].mxu0
        %2296 = vmatprep.mubr.bf16.mxu0 0
        %2297 = vmatmul.mubr.bf16.gmra.mrb[0].mxu0 %v2160
        %v2298 = vpop.f32.mrb[0].mxu0
        %v2299 = vadd.f32 %v2190, %v2298
        %v2300 = vpop.f32.mrb[0].mxu0
        %v2301 = vpop.f32.mrb[0].mxu0
        %v2302 = vadd.f32 %v2190, %v2301
        %v2303 = vpop.f32.mrb[0].mxu0
        %2304 = vmatprep.mubr.bf16.mxu0 0
        %2305 = vmatmul.mubr.bf16.gmra.mrb[0].mxu0 %v2161
        %v2306 = vpop.f32.mrb[0].mxu0
        %v2307 = vadd.f32 %v2190, %v2306
        %v2308 = vpop.f32.mrb[0].mxu0
        %v2309 = vpop.f32.mrb[0].mxu0
        %v2310 = vadd.f32 %v2190, %v2309
        %v2311 = vpop.f32.mrb[0].mxu0
        %2312 = vmatprep.mubr.bf16.mxu0 0
        %2313 = vmatmul.mubr.bf16.gmra.mrb[0].mxu0 %v2162
        %v2314 = vpop.f32.mrb[0].mxu0
        %v2315 = vadd.f32 %v2190, %v2314
        %v2316 = vpop.f32.mrb[0].mxu0
        %v2317 = vpop.f32.mrb[0].mxu0
        %v2318 = vadd.f32 %v2190, %v2317
        %v2319 = vpop.f32.mrb[0].mxu0
        %2320 = vmatprep.mubr.bf16.mxu0 0
        %2321 = vmatmul.mubr.bf16.gmra.mrb[0].mxu0 %v2163
        %v2322 = vpop.f32.mrb[0].mxu0
        %v2323 = vadd.f32 %v2190, %v2322
        %v2324 = vpop.f32.mrb[0].mxu0
        %v2325 = vpop.f32.mrb[0].mxu0
        %v2326 = vadd.f32 %v2190, %v2325
        %v2327 = vpop.f32.mrb[0].mxu0
        %2328 = vmatprep.mubr.bf16.mxu0 0
        %2329 = vmatmul.mubr.bf16.gmra.mrb[0].mxu0 %v2164
        %v2330 = vpop.f32.mrb[0].mxu0
        %v2331 = vadd.f32 %v2190, %v2330
        %v2332 = vpop.f32.mrb[0].mxu0
        %v2333 = vpop.f32.mrb[0].mxu0
        %v2334 = vadd.f32 %v2190, %v2333
        %v2335 = vpop.f32.mrb[0].mxu0
        %2336 = vmatprep.mubr.bf16.mxu0 0
        %2337 = vmatmul.mubr.bf16.gmra.mrb[0].mxu0 %v2165
        %v2338 = vpop.f32.mrb[0].mxu0
        %v2339 = vadd.f32 %v2190, %v2338
        %v2340 = vpop.f32.mrb[0].mxu0
        %v2341 = vpop.f32.mrb[0].mxu0
        %v2342 = vadd.f32 %v2190, %v2341
        %v2343 = vpop.f32.mrb[0].mxu0
        %2344 = vmatprep.mubr.bf16.mxu0 0
        %2345 = vmatmul.mubr.bf16.gmra.mrb[0].mxu0 %v2166
        %v2346 = vpop.f32.mrb[0].mxu0
        %v2347 = vadd.f32 %v2190, %v2346
        %v2348 = vpop.f32.mrb[0].mxu0
        %v2349 = vpop.f32.mrb[0].mxu0
        %v2350 = vpop.f32.mrb[0].mxu0
        %2351 = vdwg.mxu0
        %v2352 = vadd.f32 %v2275, %v1924
        %v2353 = vadd.f32 %v2278, %v1925
        %v2354 = vadd.f32 %v2283, %v1926
        %v2355 = vadd.f32 %v2286, %v1927
        %v2356 = vadd.f32 %v2291, %v1928
        %v2357 = vadd.f32 %v2294, %v1929
        %v2358 = vadd.f32 %v2299, %v1930
        %v2359 = vadd.f32 %v2302, %v1931
        %v2360 = vadd.f32 %v2307, %v1932
        %v2361 = vadd.f32 %v2310, %v1933
        %v2362 = vadd.f32 %v2315, %v1934
        %v2363 = vadd.f32 %v2318, %v1935
        %v2364 = vadd.f32 %v2323, %v1936
        %v2365 = vadd.f32 %v2326, %v1937
        %v2366 = vadd.f32 %v2331, %v1938
        %v2367 = vadd.f32 %v2334, %v1939
        %v2368 = vadd.f32 %v2339, %v1940
        %v2369 = vadd.f32 %v2342, %v1941
        %v2370 = vadd.f32 %v2347, %v1942
        %v2371 = vmax.f32 %v2352, 0.0
        %v2372 = vmax.f32 %v2353, 0.0
        %v2373 = vmax.f32 %v2354, 0.0
        %v2374 = vmax.f32 %v2355, 0.0
        %v2375 = vmax.f32 %v2356, 0.0
        %v2376 = vmax.f32 %v2357, 0.0
        %v2377 = vmax.f32 %v2358, 0.0
        %v2378 = vmax.f32 %v2359, 0.0
        %v2379 = vmax.f32 %v2360, 0.0
        %v2380 = vmax.f32 %v2361, 0.0
        %v2381 = vmax.f32 %v2362, 0.0
        %v2382 = vmax.f32 %v2363, 0.0
        %v2383 = vmax.f32 %v2364, 0.0
        %v2384 = vmax.f32 %v2365, 0.0
        %v2385 = vmax.f32 %v2366, 0.0
        %v2386 = vmax.f32 %v2367, 0.0
        %v2387 = vmax.f32 %v2368, 0.0
        %v2388 = vmax.f32 %v2369, 0.0
        %v2389 = vmax.f32 %v2370, 0.0
        %v2390 = vpack.c.bf16 %v2372, %v2371
        %v2391 = vpack.c.bf16 %v2374, %v2373
        %v2392 = vpack.c.bf16 %v2376, %v2375
        %v2393 = vpack.c.bf16 %v2378, %v2377
        %v2394 = vpack.c.bf16 %v2380, %v2379
        %v2395 = vpack.c.bf16 %v2382, %v2381
        %v2396 = vpack.c.bf16 %v2384, %v2383
        %v2397 = vpack.c.bf16 %v2386, %v2385
        %v2398 = vpack.c.bf16 %v2388, %v2387
        %v2399 = vpack.c.bf16 %v2389, %v2389
        %v2400 = vld [vmem:[#allocation5] sm:$0xf]
        %v2401 = vld [vmem:[#allocation5 + $0x4] sm:$0xf]
        %v2402 = vld [vmem:[#allocation5 + $0x8] sm:$0xf]
        %v2403 = vld [vmem:[#allocation5 + $0xc] sm:$0xf]
        %v2404 = vld [vmem:[#allocation5 + $0x10] sm:$0xf]
        %v2405 = vld [vmem:[#allocation5 + $0x14] sm:$0xf]
        %v2406 = vld [vmem:[#allocation5 + $0x18] sm:$0xf]
        %v2407 = vld [vmem:[#allocation5 + $0x1c] sm:$0xf]
        %v2408 = vld [vmem:[#allocation5 + $0x20] sm:$0xf]
        %v2409 = vld [vmem:[#allocation5 + $0x24] sm:$0xf]
        %v2410 = vld [vmem:[#allocation5 + $0x28] sm:$0xf]
        %v2411 = vld [vmem:[#allocation5 + $0x2c] sm:$0xf]
        %v2412 = vld [vmem:[#allocation5 + $0x30] sm:$0xf]
        %v2413 = vld [vmem:[#allocation5 + $0x34] sm:$0xf]
        %v2414 = vld [vmem:[#allocation5 + $0x38] sm:$0xf]
        %v2415 = vld [vmem:[#allocation5 + $0x3c] sm:$0xf]
        %v2416 = vld [vmem:[%s8] sm:$0x1]
        %v2418 = vlaneseq
        %v2419 = vshrl.u32 %v2418, 7
        %v2420 = vsub.s32 0, %v2419
        %v2421 = vrot.slane %v2416, %v2420
        %v2439 = vunpack.c.l.b16 %v2400
        %v2440 = vunpack.c.l.b16 %v2401
        %v2441 = vunpack.c.l.b16 %v2402
        %v2442 = vunpack.c.l.b16 %v2403
        %v2443 = vunpack.c.l.b16 %v2404
        %v2444 = vunpack.c.l.b16 %v2405
        %v2445 = vunpack.c.l.b16 %v2406
        %v2446 = vunpack.c.l.b16 %v2407
        %v2447 = vunpack.c.l.b16 %v2408
        %v2448 = vunpack.c.l.b16 %v2409
        %v2449 = vunpack.c.l.b16 %v2410
        %v2450 = vunpack.c.l.b16 %v2411
        %v2451 = vunpack.c.l.b16 %v2412
        %v2452 = vunpack.c.l.b16 %v2413
        %v2453 = vunpack.c.l.b16 %v2414
        %v2454 = vunpack.c.l.b16 %v2415
        %v2455 = vpack.c.b16 %v2440, %v2439
        %v2456 = vpack.c.b16 %v2442, %v2441
        %v2457 = vpack.c.b16 %v2444, %v2443
        %v2458 = vpack.c.b16 %v2446, %v2445
        %v2459 = vpack.c.b16 %v2448, %v2447
        %v2460 = vpack.c.b16 %v2450, %v2449
        %v2461 = vpack.c.b16 %v2452, %v2451
        %v2462 = vpack.c.b16 %v2454, %v2453
        %2471 = vmatprep.subr.bf16.mxu0 0
        %2472 = vmatpush1.bf16.msra.mxu0 %v2455
        %2473 = vmatprep.subr.bf16.mxu0 0
        %2474 = vmatpush1.bf16.msra.mxu0 %v2456
        %2475 = vmatprep.subr.bf16.mxu0 0
        %2476 = vmatpush1.bf16.msra.mxu0 %v2457
        %2477 = vmatprep.subr.bf16.mxu0 0
        %2478 = vmatpush1.bf16.msra.mxu0 %v2458
        %2479 = vmatprep.subr.bf16.mxu0 0
        %2480 = vmatpush1.bf16.msra.mxu0 %v2459
        %2481 = vmatprep.subr.bf16.mxu0 0
        %2482 = vmatpush1.bf16.msra.mxu0 %v2460
        %2483 = vmatprep.subr.bf16.mxu0 0
        %2484 = vmatpush1.bf16.msra.mxu0 %v2461
        %2485 = vmatprep.subr.bf16.mxu0 0
        %2486 = vmatpush1.bf16.msra.mxu0 %v2462
        %2487 = vmatprep.subr.bf16.mxu0 0
        %2488 = vmatpush1.bf16.msra.mxu0 0
        %2489 = vmatprep.subr.bf16.mxu0 0
        %2490 = vmatpush1.bf16.msra.mxu0 0
        %2491 = vmatprep.subr.bf16.mxu0 0
        %2492 = vmatpush1.bf16.msra.mxu0 0
        %2493 = vmatprep.subr.bf16.mxu0 0
        %2494 = vmatpush1.bf16.msra.mxu0 0
        %2495 = vmatprep.subr.bf16.mxu0 0
        %2496 = vmatpush1.bf16.msra.mxu0 0
        %2497 = vmatprep.subr.bf16.mxu0 0
        %2498 = vmatpush1.bf16.msra.mxu0 0
        %2499 = vmatprep.subr.bf16.mxu0 0
        %2500 = vmatpush1.bf16.msra.mxu0 0
        %2501 = vmatprep.subr.bf16.mxu0 0
        %2502 = vmatpush1.bf16.msra.mxu0 0
        %2503 = vmatprep.mubr.bf16.mxu0 0
        %2504 = vmatmul.mubr.bf16.gmra.mrb[0].mxu0 %v2390
        %v2505 = vpop.f32.mrb[0].mxu0
        %v2506 = vadd.f32 %v2421, %v2505
        %v2507 = vpop.f32.mrb[0].mxu0
        %v2508 = vpop.f32.mrb[0].mxu0
        %v2509 = vadd.f32 %v2421, %v2508
        %v2510 = vpop.f32.mrb[0].mxu0
        %2511 = vmatprep.mubr.bf16.mxu0 0
        %2512 = vmatmul.mubr.bf16.gmra.mrb[0].mxu0 %v2391
        %v2513 = vpop.f32.mrb[0].mxu0
        %v2514 = vadd.f32 %v2421, %v2513
        %v2515 = vpop.f32.mrb[0].mxu0
        %v2516 = vpop.f32.mrb[0].mxu0
        %v2517 = vadd.f32 %v2421, %v2516
        %v2518 = vpop.f32.mrb[0].mxu0
        %2519 = vmatprep.mubr.bf16.mxu0 0
        %2520 = vmatmul.mubr.bf16.gmra.mrb[0].mxu0 %v2392
        %v2521 = vpop.f32.mrb[0].mxu0
        %v2522 = vadd.f32 %v2421, %v2521
        %v2523 = vpop.f32.mrb[0].mxu0
        %v2524 = vpop.f32.mrb[0].mxu0
        %v2525 = vadd.f32 %v2421, %v2524
        %v2526 = vpop.f32.mrb[0].mxu0
        %2527 = vmatprep.mubr.bf16.mxu0 0
        %2528 = vmatmul.mubr.bf16.gmra.mrb[0].mxu0 %v2393
        %v2529 = vpop.f32.mrb[0].mxu0
        %v2530 = vadd.f32 %v2421, %v2529
        %v2531 = vpop.f32.mrb[0].mxu0
        %v2532 = vpop.f32.mrb[0].mxu0
        %v2533 = vadd.f32 %v2421, %v2532
        %v2534 = vpop.f32.mrb[0].mxu0
        %2535 = vmatprep.mubr.bf16.mxu0 0
        %2536 = vmatmul.mubr.bf16.gmra.mrb[0].mxu0 %v2394
        %v2537 = vpop.f32.mrb[0].mxu0
        %v2538 = vadd.f32 %v2421, %v2537
        %v2539 = vpop.f32.mrb[0].mxu0
        %v2540 = vpop.f32.mrb[0].mxu0
        %v2541 = vadd.f32 %v2421, %v2540
        %v2542 = vpop.f32.mrb[0].mxu0
        %2543 = vmatprep.mubr.bf16.mxu0 0
        %2544 = vmatmul.mubr.bf16.gmra.mrb[0].mxu0 %v2395
        %v2545 = vpop.f32.mrb[0].mxu0
        %v2546 = vadd.f32 %v2421, %v2545
        %v2547 = vpop.f32.mrb[0].mxu0
        %v2548 = vpop.f32.mrb[0].mxu0
        %v2549 = vadd.f32 %v2421, %v2548
        %v2550 = vpop.f32.mrb[0].mxu0
        %2551 = vmatprep.mubr.bf16.mxu0 0
        %2552 = vmatmul.mubr.bf16.gmra.mrb[0].mxu0 %v2396
        %v2553 = vpop.f32.mrb[0].mxu0
        %v2554 = vadd.f32 %v2421, %v2553
        %v2555 = vpop.f32.mrb[0].mxu0
        %v2556 = vpop.f32.mrb[0].mxu0
        %v2557 = vadd.f32 %v2421, %v2556
        %v2558 = vpop.f32.mrb[0].mxu0
        %2559 = vmatprep.mubr.bf16.mxu0 0
        %2560 = vmatmul.mubr.bf16.gmra.mrb[0].mxu0 %v2397
        %v2561 = vpop.f32.mrb[0].mxu0
        %v2562 = vadd.f32 %v2421, %v2561
        %v2563 = vpop.f32.mrb[0].mxu0
        %v2564 = vpop.f32.mrb[0].mxu0
        %v2565 = vadd.f32 %v2421, %v2564
        %v2566 = vpop.f32.mrb[0].mxu0
        %2567 = vmatprep.mubr.bf16.mxu0 0
        %2568 = vmatmul.mubr.bf16.gmra.mrb[0].mxu0 %v2398
        %v2569 = vpop.f32.mrb[0].mxu0
        %v2570 = vadd.f32 %v2421, %v2569
        %v2571 = vpop.f32.mrb[0].mxu0
        %v2572 = vpop.f32.mrb[0].mxu0
        %v2573 = vadd.f32 %v2421, %v2572
        %v2574 = vpop.f32.mrb[0].mxu0
        %2575 = vmatprep.mubr.bf16.mxu0 0
        %2576 = vmatmul.mubr.bf16.gmra.mrb[0].mxu0 %v2399
        %v2577 = vpop.f32.mrb[0].mxu0
        %v2578 = vadd.f32 %v2421, %v2577
        %v2579 = vpop.f32.mrb[0].mxu0
        %v2580 = vpop.f32.mrb[0].mxu0
        %v2581 = vpop.f32.mrb[0].mxu0
        %2582 = vdwg.mxu0
        %2583 = vst [vmem:[%s356] sm:$0xff] %v2506
        %2584 = vst [vmem:[%s356 + $0x8] sm:$0xff] %v2509
        %2585 = vst [vmem:[%s356 + $0x10] sm:$0xff] %v2514
        %2586 = vst [vmem:[%s356 + $0x18] sm:$0xff] %v2517
        %2587 = vst [vmem:[%s356 + $0x20] sm:$0xff] %v2522
        %2588 = vst [vmem:[%s356 + $0x28] sm:$0xff] %v2525
        %2589 = vst [vmem:[%s356 + $0x30] sm:$0xff] %v2530
        %2590 = vst [vmem:[%s356 + $0x38] sm:$0xff] %v2533
        %2591 = vst [vmem:[%s356 + $0x40] sm:$0xff] %v2538
        %2592 = vst [vmem:[%s356 + $0x48] sm:$0xff] %v2541
        %2593 = vst [vmem:[%s356 + $0x50] sm:$0xff] %v2546
        %2594 = vst [vmem:[%s356 + $0x58] sm:$0xff] %v2549
        %2595 = vst [vmem:[%s356 + $0x60] sm:$0xff] %v2554
        %2596 = vst [vmem:[%s356 + $0x68] sm:$0xff] %v2557
        %2597 = vst [vmem:[%s356 + $0x70] sm:$0xff] %v2562
        %2598 = vst [vmem:[%s356 + $0x78] sm:$0xff] %v2565
        %2599 = vst [vmem:[%s356 + $0x80] sm:$0xff] %v2570
        %2600 = vst [vmem:[%s356 + $0x88] sm:$0xff] %v2573
        %2601 = vst [vmem:[%s356 + $0x90] sm:$0xff] %v2578
        %s2602 = sand.u32 %s227, 1
        %s2603 = scalar_lea.sflag [#allocation4], %s2602
        %s2604 = sand.u32 %s227, 1
        %s2605 = smul.addr %s2604, 152
        %s2606 = scalar_lea.vmem [#allocation7], %s2605
        // Predicated region
        $region65: #{tpu_custom_call.1} parent=55 // pred_check
          %p2607 = pneg %p237
        $region66: #{tpu_custom_call.1} parent=55 // pred_check_branch
          %2609 = sbr.rel (%p2607) target = $region68
        $region67: #{tpu_custom_call.1} parent=55 // pred_region
          %s2610 = smul.u32 19, %s25
          %s2612 = ssub.s32 2432, 2432
          %2613 = vsyncadd %s2603, %s2612
          %s2614 = smul.addr %s2610, 128
          %s2615 = scalar_lea.hbm %s9, %s2614
          %s2616 = sshll.u32 %s2606, 4
          %s2617 = int_to_ptr.vmem [resolvable:$true] %s2616
          %2622 = dma.vmem_to_hbm [thread:$0]  %s2617, 2432, %s2615, %s2603, 128, 128, 8
        $region68: #{tpu_custom_call.1} parent=55 // pred_fallthru
          _
      $region56: #{tpu_custom_call.1} parent=5 // pred_fallthru
        _
      %p2623 = scmp.le.s32.totalorder 2, %s20
      // Predicated region
      $region69: #{tpu_custom_call.1} parent=5 // pred_check
        %p2624 = pneg %p2623
      $region70: #{tpu_custom_call.1} parent=5 // pred_check_branch
        %2626 = sbr.rel (%p2624) target = $region72
      $region71: #{tpu_custom_call.1} parent=5 // pred_region
        %s2627 = ssub.s32 %s20, 2
        // Predicated region
        $region73: #{tpu_custom_call.1} parent=71 // pred_check
          %p2628 = pneg %p243
        $region74: #{tpu_custom_call.1} parent=71 // pred_check_branch
          %2630 = sbr.rel (%p2628) target = $region76
        $region75: #{tpu_custom_call.1} parent=71 // pred_region
          %s2631 = sand.u32 %s228, 1
          %s2632 = scalar_lea.sflag [#allocation4], %s2631
          %s2633 = sand.u32 %s228, 1
          %s2634 = smul.addr %s2633, 152
          %s2635 = scalar_lea.vmem [#allocation7], %s2634
          %2636 = dma.done %s2632, 2432
        $region76: #{tpu_custom_call.1} parent=71 // pred_fallthru
          _
      $region72: #{tpu_custom_call.1} parent=5 // pred_fallthru
        _
    $region6: #{tpu_custom_call.1} parent=1 // loop_footer
      %s24 = sadd.s32 1, %s20
    $region7: #{tpu_custom_call.1} parent=1 // loop_footer_branch
      %19 = sbr.rel target = $region3
    $region8: #{tpu_custom_call.1} parent=1 // loop_exit
      _
    %2637 = vsyncpa [#allocation3], 1
    %s2638 = scalar_lea.sflag [#allocation3], 1
    %2639 = vsyncpa %s2638, 1
    %2640 = vsyncpa [#allocation6], 1
    %2641 = vsyncpa [#allocation4], 1
    %s2642 = scalar_lea.sflag [#allocation4], 1
    %2643 = vsyncpa %s2642, 1

</llo_original>
